<compile_context>
chip_gen: v7x
topology: tpu7x:2x2x1
jax: 0.10.0
libtpu: 0.0.40
codegen_flags: <defaults>
</compile_context>

<pallas_src>
import functools

import jax
import jax.numpy as jnp
from jax.experimental import pallas as pl
from jax.experimental.pallas import tpu as pltpu


def _ce_rowloss_kernel(x_ref, tgt_ref, loss_ref, *, ignore_index):
    """Per-row cross entropy: loss = (max + lse) - x[target], 0 for ignored rows."""
    x = x_ref[...].astype(jnp.float32)                     # (R, C)
    tgt = tgt_ref[...]                                     # (R, 1) int32

    # Numerically stable log-sum-exp along the class (lane) axis.
    m = jnp.max(x, axis=-1, keepdims=True)                 # (R, 1)
    lse = jnp.log(jnp.sum(jnp.exp(x - m), axis=-1, keepdims=True))  # (R, 1)

    # Gather x[row, target[row]] via a one-hot select (no dynamic gather on TPU).
    col = jax.lax.broadcasted_iota(jnp.int32, x.shape, 1)  # (R, C)
    onehot = col == tgt                                    # (R, C) bool
    x_t = jnp.sum(jnp.where(onehot, x, 0.0), axis=-1, keepdims=True)  # (R, 1)

    loss = (m + lse) - x_t                                 # (R, 1) = -logprob[target]
    valid = tgt != ignore_index                            # (R, 1) bool
    loss_ref[...] = jnp.where(valid, loss, 0.0).astype(loss_ref.dtype)


def cross_entropy_loss(predict, target, *, ignore_index=-1, block_rows=None):
    """PyTorch-style CrossEntropyLoss with ignore_index, mean over valid elements.

    predict: (N, C) or (N, C, H, W) logits (f32 or bf16).
    target:  (N,)   or (N, H, W)    integer class indices (ignore_index allowed).
    Returns a scalar float32 loss.
    """
    if predict.ndim == 4:
        c = predict.shape[1]
        x = jnp.transpose(predict, (0, 2, 3, 1)).reshape(-1, c)
        tgt = target.reshape(-1)
    elif predict.ndim == 2:
        c = predict.shape[1]
        x = predict
        tgt = target.reshape(-1)
    else:
        raise ValueError("predict must be (N, C) or (N, C, H, W)")

    rows = x.shape[0]
    tgt = tgt.astype(jnp.int32)
    valid_count = jnp.sum((tgt != ignore_index).astype(jnp.float32))

    # Auto-size the row tile so the logits block is ~4 MiB (capped at 1024 rows),
    # keeping the double-buffered working set comfortably inside VMEM on
    # v5e / v6e (128 MiB) and v7x (64 MiB).
    if block_rows is None:
        bytes_per_row = c * x.dtype.itemsize
        target_tile_bytes = 4 * 1024 * 1024
        block_rows = int(max(8, min(1024, target_tile_bytes // bytes_per_row)))
        block_rows -= block_rows % 8
        block_rows = min(block_rows, ((rows + 7) // 8) * 8)
    assert block_rows % 8 == 0, "block_rows must be a multiple of 8"

    # Pad the row count up to a multiple of block_rows; padded rows get
    # target == ignore_index so they contribute nothing.
    padded = pl.cdiv(rows, block_rows) * block_rows
    if padded != rows:
        x = jnp.pad(x, ((0, padded - rows), (0, 0)))
        tgt = jnp.pad(tgt, (0, padded - rows), constant_values=ignore_index)

    tgt2d = tgt.reshape(padded, 1)
    num_blocks = padded // block_rows

    kernel = functools.partial(_ce_rowloss_kernel, ignore_index=ignore_index)

    row_losses = pl.pallas_call(
        kernel,
        out_shape=jax.ShapeDtypeStruct((padded, 1), jnp.float32),
        grid_spec=pltpu.PrefetchScalarGridSpec(
            num_scalar_prefetch=0,
            grid=(num_blocks,),
            in_specs=[
                pl.BlockSpec((block_rows, c), lambda i: (i, 0)),
                pl.BlockSpec((block_rows, 1), lambda i: (i, 0)),
            ],
            out_specs=pl.BlockSpec((block_rows, 1), lambda i: (i, 0)),
        ),
        compiler_params=pltpu.CompilerParams(
            dimension_semantics=("parallel",),
            vmem_limit_bytes=64 * 1024 * 1024,
        ),
    )(x, tgt2d)

    total = jnp.sum(row_losses)
    # Mean over non-ignored elements (matches PyTorch's default 'mean' reduction
    # with ignore_index).
    return total / valid_count


if __name__ == "__main__":
    key = jax.random.PRNGKey(0)
    kx, kt = jax.random.split(key)

    # Segmentation-style shapes: predict (N, C, H, W), target (N, H, W).
    N, C, H, W = 2, 128, 16, 16
    predict = jax.random.normal(kx, (N, C, H, W), dtype=jnp.float32)
    target = jax.random.randint(kt, (N, H, W), 0, C, dtype=jnp.int32)
    # Sprinkle some ignored pixels (module default ignore_index=-1).
    target = target.at[0, 0, :4].set(-1)
    target = target.at[1, 5, 7].set(-1)

    loss = cross_entropy_loss(predict, target, ignore_index=-1)
    jax.block_until_ready(loss)

    # Pure-JAX reference (cross entropy with ignore_index, mean over valid).
    x2 = jnp.transpose(predict, (0, 2, 3, 1)).reshape(-1, C)
    t2 = target.reshape(-1)
    logp = jax.nn.log_softmax(x2, axis=-1)
    valid = t2 != -1
    t_safe = jnp.where(valid, t2, 0)
    nll = -jnp.take_along_axis(logp, t_safe[:, None], axis=-1)[:, 0]
    ref = jnp.sum(jnp.where(valid, nll, 0.0)) / jnp.sum(valid.astype(jnp.float32))

    assert jnp.allclose(loss, ref, atol=1e-5, rtol=1e-5), (loss, ref)
    print("KERNEL_OK")
</pallas_src>

<mosaic_0001>
module attributes {stable_mosaic.version = 11 : i64} {
  func.func @_ce_rowloss_kernel(%arg0: i32, %arg1: memref<512x128xf32, #tpu.memory_space<vmem>>, %arg2: memref<512x1xi32, #tpu.memory_space<vmem>>, %arg3: memref<512x1xf32, #tpu.memory_space<vmem>>) attributes {dimension_semantics = [#tpu.dimension_semantics<parallel>], iteration_bounds = array<i64: 1>, scalar_prefetch = 0 : i64, scratch_operands = 0 : i64, tpu.core_type = #tpu.core_type<tc>, window_params = [{transform_indices = @transform_0, window_bounds = array<i64: 512, 128>}, {transform_indices = @transform_1, window_bounds = array<i64: 512, 1>}, {transform_indices = @transform_2, window_bounds = array<i64: 512, 1>}]} {
    %c0 = arith.constant 0 : index
    %c0_0 = arith.constant 0 : index
    %0 = vector.load %arg1[%c0, %c0_0] : memref<512x128xf32, #tpu.memory_space<vmem>>, vector<512x128xf32>
    %c0_1 = arith.constant 0 : index
    %c0_2 = arith.constant 0 : index
    %1 = vector.load %arg2[%c0_1, %c0_2] : memref<512x1xi32, #tpu.memory_space<vmem>>, vector<512x1xi32>
    %cst = arith.constant dense<0xFF800000> : vector<512xf32>
    %2 = vector.multi_reduction <maximumf>, %0, %cst [1] : vector<512x128xf32> to vector<512xf32>
    %3 = vector.shape_cast %2 : vector<512xf32> to vector<512x1xf32>
    %4 = vector.broadcast %3 : vector<512x1xf32> to vector<512x128xf32>
    %5 = arith.subf %0, %4 : vector<512x128xf32>
    %6 = math.exp %5 : vector<512x128xf32>
    %cst_3 = arith.constant dense<0.000000e+00> : vector<512xf32>
    %7 = vector.multi_reduction <add>, %6, %cst_3 [1] : vector<512x128xf32> to vector<512xf32>
    %8 = vector.shape_cast %7 : vector<512xf32> to vector<512x1xf32>
    %9 = math.log %8 : vector<512x1xf32>
    %10 = tpu.iota {dimensions = array<i32: 1>} : vector<512x128xi32>
    %11 = vector.broadcast %1 : vector<512x1xi32> to vector<512x128xi32>
    %12 = arith.cmpi eq, %10, %11 : vector<512x128xi32>
    %cst_4 = arith.constant 0.000000e+00 : f32
    %13 = vector.broadcast %cst_4 : f32 to vector<512x128xf32>
    %14 = arith.select %12, %0, %13 : vector<512x128xi1>, vector<512x128xf32>
    %cst_5 = arith.constant dense<0.000000e+00> : vector<512xf32>
    %15 = vector.multi_reduction <add>, %14, %cst_5 [1] : vector<512x128xf32> to vector<512xf32>
    %16 = vector.shape_cast %15 : vector<512xf32> to vector<512x1xf32>
    %17 = arith.addf %3, %9 : vector<512x1xf32>
    %18 = arith.subf %17, %16 : vector<512x1xf32>
    %c-1_i32 = arith.constant -1 : i32
    %19 = vector.broadcast %c-1_i32 : i32 to vector<512x1xi32>
    %20 = arith.cmpi ne, %1, %19 : vector<512x1xi32>
    %cst_6 = arith.constant 0.000000e+00 : f32
    %21 = vector.broadcast %cst_6 : f32 to vector<512x1xf32>
    %22 = arith.select %20, %18, %21 : vector<512x1xi1>, vector<512x1xf32>
    %c0_7 = arith.constant 0 : index
    %c0_8 = arith.constant 0 : index
    %23 = vector.load %arg3[%c0_7, %c0_8] : memref<512x1xf32, #tpu.memory_space<vmem>>, vector<512x1xf32>
    tpu.vector_store %arg3[%c0_7, %c0_8], %22 {strides = array<i32>} : memref<512x1xf32, #tpu.memory_space<vmem>>, vector<512x1xf32>,
    return
  }
  func.func @transform_0(%arg0: i32) -> (i32, i32) {
    %c0_i32 = arith.constant 0 : i32
    %c0_i32_0 = arith.constant 0 : i32
    return %arg0, %c0_i32 : i32, i32
  }
  func.func @transform_1(%arg0: i32) -> (i32, i32) {
    %c0_i32 = arith.constant 0 : i32
    %c0_i32_0 = arith.constant 0 : i32
    return %arg0, %c0_i32 : i32, i32
  }
  func.func @transform_2(%arg0: i32) -> (i32, i32) {
    %c0_i32 = arith.constant 0 : i32
    %c0_i32_0 = arith.constant 0 : i32
    return %arg0, %c0_i32 : i32, i32
  }
}

</mosaic_0001>

<llo_original>
// kernel: tpu_custom_call.1
$region0: #{tpu_custom_call.1}
  #allocation0 [shape = 'u32[]', space=smem, size = 0x4, offset = 0x4, fixed_abs, tag = 'smem constant byte address 0x4 - core index']
  #allocation1 [shape = 'u32[144,128]{1,0:T(1,128)}', space=vmem, size = 0x12000, scoped, tag = 'internal scratch']
  %s0 = inlined_call_operand.hbm [shape: f32[512,128], index: 0, kind: input, shape index: {}]
  %s1 = inlined_call_operand.hbm [shape: s32[512,1], index: 1, kind: input, shape index: {}]
  %s2 = inlined_call_operand.hbm [shape: f32[512,1], index: 2, kind: output, shape index: {}]
  %s3 = sld [smem:[#allocation0]]
  $region26: #{tpu_custom_call.1} parent=0
    _
  %s5 = ssub.s32 1, %s3
  %s6 = scalar_select 0, %s5, %s3
  $region1: #{tpu_custom_call.1} parent=0
    #allocation2 [shape = 'u8[262144]{0}', space=vmem, size = 0x40000, scoped, tag = 'input window, operand 0, single buffered']
    #allocation3 [shape = 's32[1]{0}', space=sflag, size = 0x4, scoped, tag = 'scoped memory for tpu_custom_call.1']
    #allocation4 [shape = 's32[1]{0}', space=sflag, size = 0x4, scoped, tag = 'scoped memory for tpu_custom_call.1']
    #allocation5 [shape = 'u8[262144]{0}', space=vmem, size = 0x40000, scoped, tag = 'input window, operand 1, single buffered']
    #allocation6 [shape = 's32[1]{0}', space=sflag, size = 0x4, scoped, tag = 'scoped memory for tpu_custom_call.1']
    #allocation7 [shape = 'u8[262144]{0}', space=vmem, size = 0x40000, scoped, tag = 'output window, operand 0, single buffered']
    %7 = vsyncpa [#allocation3], 0
    %8 = vsyncpa [#allocation6], 0
    %9 = vsyncpa [#allocation4], 0
    // Predicated region
    $region2: #{tpu_custom_call.1} parent=1 // pred_check
      _
    $region3: #{tpu_custom_call.1} parent=1 // pred_check_branch
      %11 = sbr.rel (0) target = $region5
    $region4: #{tpu_custom_call.1} parent=1 // pred_region
      %s13 = ssub.s32 8192, 8192
      %14 = vsyncadd [#allocation3], %s13
      %s15 = sshll.u32 [#allocation2], 4
      %s16 = int_to_ptr.vmem [resolvable:$true] %s15
      %21 = dma.hbm_to_vmem [thread:$0]  %s0, 8192, %s16, [#allocation3], 128, 128, 8
    $region5: #{tpu_custom_call.1} parent=1 // pred_fallthru
      _
    // Predicated region
    $region6: #{tpu_custom_call.1} parent=1 // pred_check
      _
    $region7: #{tpu_custom_call.1} parent=1 // pred_check_branch
      %23 = sbr.rel (0) target = $region9
    $region8: #{tpu_custom_call.1} parent=1 // pred_region
      %s25 = ssub.s32 8192, 8192
      %26 = vsyncadd [#allocation6], %s25
      %s27 = sshll.u32 [#allocation5], 4
      %s28 = int_to_ptr.vmem [resolvable:$true] %s27
      %33 = dma.hbm_to_vmem [thread:$0]  %s1, 8192, %s28, [#allocation6], 128, 128, 8
    $region9: #{tpu_custom_call.1} parent=1 // pred_fallthru
      _
    // Predicated region
    $region10: #{tpu_custom_call.1} parent=1 // pred_check
      _
    $region11: #{tpu_custom_call.1} parent=1 // pred_check_branch
      %35 = sbr.rel (0) target = $region13
    $region12: #{tpu_custom_call.1} parent=1 // pred_region
      %36 = dma.done [#allocation3], 8192
    $region13: #{tpu_custom_call.1} parent=1 // pred_fallthru
      _
    // Predicated region
    $region14: #{tpu_custom_call.1} parent=1 // pred_check
      _
    $region15: #{tpu_custom_call.1} parent=1 // pred_check_branch
      %38 = sbr.rel (0) target = $region17
    $region16: #{tpu_custom_call.1} parent=1 // pred_region
      %39 = dma.done [#allocation6], 8192
    $region17: #{tpu_custom_call.1} parent=1 // pred_fallthru
      _
    %v40 = vld [vmem:[#allocation2] sm:$0xff]
    %v41 = vld [vmem:[#allocation2 + $0x8] sm:$0xff]
    %v42 = vld [vmem:[#allocation2 + $0x10] sm:$0xff]
    %v43 = vld [vmem:[#allocation2 + $0x18] sm:$0xff]
    %v44 = vld [vmem:[#allocation2 + $0x20] sm:$0xff]
    %v45 = vld [vmem:[#allocation2 + $0x28] sm:$0xff]
    %v46 = vld [vmem:[#allocation2 + $0x30] sm:$0xff]
    %v47 = vld [vmem:[#allocation2 + $0x38] sm:$0xff]
    %v48 = vld [vmem:[#allocation2 + $0x40] sm:$0xff]
    %v49 = vld [vmem:[#allocation2 + $0x48] sm:$0xff]
    %v50 = vld [vmem:[#allocation2 + $0x50] sm:$0xff]
    %v51 = vld [vmem:[#allocation2 + $0x58] sm:$0xff]
    %v52 = vld [vmem:[#allocation2 + $0x60] sm:$0xff]
    %v53 = vld [vmem:[#allocation2 + $0x68] sm:$0xff]
    %v54 = vld [vmem:[#allocation2 + $0x70] sm:$0xff]
    %v55 = vld [vmem:[#allocation2 + $0x78] sm:$0xff]
    %v56 = vld [vmem:[#allocation2 + $0x80] sm:$0xff]
    %v57 = vld [vmem:[#allocation2 + $0x88] sm:$0xff]
    %v58 = vld [vmem:[#allocation2 + $0x90] sm:$0xff]
    %v59 = vld [vmem:[#allocation2 + $0x98] sm:$0xff]
    %v60 = vld [vmem:[#allocation2 + $0xa0] sm:$0xff]
    %v61 = vld [vmem:[#allocation2 + $0xa8] sm:$0xff]
    %v62 = vld [vmem:[#allocation2 + $0xb0] sm:$0xff]
    %v63 = vld [vmem:[#allocation2 + $0xb8] sm:$0xff]
    %v64 = vld [vmem:[#allocation2 + $0xc0] sm:$0xff]
    %v65 = vld [vmem:[#allocation2 + $0xc8] sm:$0xff]
    %v66 = vld [vmem:[#allocation2 + $0xd0] sm:$0xff]
    %v67 = vld [vmem:[#allocation2 + $0xd8] sm:$0xff]
    %v68 = vld [vmem:[#allocation2 + $0xe0] sm:$0xff]
    %v69 = vld [vmem:[#allocation2 + $0xe8] sm:$0xff]
    %v70 = vld [vmem:[#allocation2 + $0xf0] sm:$0xff]
    %v71 = vld [vmem:[#allocation2 + $0xf8] sm:$0xff]
    %v72 = vld [vmem:[#allocation2 + $0x100] sm:$0xff]
    %v73 = vld [vmem:[#allocation2 + $0x108] sm:$0xff]
    %v74 = vld [vmem:[#allocation2 + $0x110] sm:$0xff]
    %v75 = vld [vmem:[#allocation2 + $0x118] sm:$0xff]
    %v76 = vld [vmem:[#allocation2 + $0x120] sm:$0xff]
    %v77 = vld [vmem:[#allocation2 + $0x128] sm:$0xff]
    %v78 = vld [vmem:[#allocation2 + $0x130] sm:$0xff]
    %v79 = vld [vmem:[#allocation2 + $0x138] sm:$0xff]
    %v80 = vld [vmem:[#allocation2 + $0x140] sm:$0xff]
    %v81 = vld [vmem:[#allocation2 + $0x148] sm:$0xff]
    %v82 = vld [vmem:[#allocation2 + $0x150] sm:$0xff]
    %v83 = vld [vmem:[#allocation2 + $0x158] sm:$0xff]
    %v84 = vld [vmem:[#allocation2 + $0x160] sm:$0xff]
    %v85 = vld [vmem:[#allocation2 + $0x168] sm:$0xff]
    %v86 = vld [vmem:[#allocation2 + $0x170] sm:$0xff]
    %v87 = vld [vmem:[#allocation2 + $0x178] sm:$0xff]
    %v88 = vld [vmem:[#allocation2 + $0x180] sm:$0xff]
    %v89 = vld [vmem:[#allocation2 + $0x188] sm:$0xff]
    %v90 = vld [vmem:[#allocation2 + $0x190] sm:$0xff]
    %v91 = vld [vmem:[#allocation2 + $0x198] sm:$0xff]
    %v92 = vld [vmem:[#allocation2 + $0x1a0] sm:$0xff]
    %v93 = vld [vmem:[#allocation2 + $0x1a8] sm:$0xff]
    %v94 = vld [vmem:[#allocation2 + $0x1b0] sm:$0xff]
    %v95 = vld [vmem:[#allocation2 + $0x1b8] sm:$0xff]
    %v96 = vld [vmem:[#allocation2 + $0x1c0] sm:$0xff]
    %v97 = vld [vmem:[#allocation2 + $0x1c8] sm:$0xff]
    %v98 = vld [vmem:[#allocation2 + $0x1d0] sm:$0xff]
    %v99 = vld [vmem:[#allocation2 + $0x1d8] sm:$0xff]
    %v100 = vld [vmem:[#allocation2 + $0x1e0] sm:$0xff]
    %v101 = vld [vmem:[#allocation2 + $0x1e8] sm:$0xff]
    %v102 = vld [vmem:[#allocation2 + $0x1f0] sm:$0xff]
    %v103 = vld [vmem:[#allocation2 + $0x1f8] sm:$0xff]
    %v104 = vld [vmem:[#allocation5] sm:$0xff]
    %v105 = vld [vmem:[#allocation5 + $0x8] sm:$0xff]
    %v106 = vld [vmem:[#allocation5 + $0x10] sm:$0xff]
    %v107 = vld [vmem:[#allocation5 + $0x18] sm:$0xff]
    %v108 = vld [vmem:[#allocation5 + $0x20] sm:$0xff]
    %v109 = vld [vmem:[#allocation5 + $0x28] sm:$0xff]
    %v110 = vld [vmem:[#allocation5 + $0x30] sm:$0xff]
    %v111 = vld [vmem:[#allocation5 + $0x38] sm:$0xff]
    %v112 = vld [vmem:[#allocation5 + $0x40] sm:$0xff]
    %v113 = vld [vmem:[#allocation5 + $0x48] sm:$0xff]
    %v114 = vld [vmem:[#allocation5 + $0x50] sm:$0xff]
    %v115 = vld [vmem:[#allocation5 + $0x58] sm:$0xff]
    %v116 = vld [vmem:[#allocation5 + $0x60] sm:$0xff]
    %v117 = vld [vmem:[#allocation5 + $0x68] sm:$0xff]
    %v118 = vld [vmem:[#allocation5 + $0x70] sm:$0xff]
    %v119 = vld [vmem:[#allocation5 + $0x78] sm:$0xff]
    %v120 = vld [vmem:[#allocation5 + $0x80] sm:$0xff]
    %v121 = vld [vmem:[#allocation5 + $0x88] sm:$0xff]
    %v122 = vld [vmem:[#allocation5 + $0x90] sm:$0xff]
    %v123 = vld [vmem:[#allocation5 + $0x98] sm:$0xff]
    %v124 = vld [vmem:[#allocation5 + $0xa0] sm:$0xff]
    %v125 = vld [vmem:[#allocation5 + $0xa8] sm:$0xff]
    %v126 = vld [vmem:[#allocation5 + $0xb0] sm:$0xff]
    %v127 = vld [vmem:[#allocation5 + $0xb8] sm:$0xff]
    %v128 = vld [vmem:[#allocation5 + $0xc0] sm:$0xff]
    %v129 = vld [vmem:[#allocation5 + $0xc8] sm:$0xff]
    %v130 = vld [vmem:[#allocation5 + $0xd0] sm:$0xff]
    %v131 = vld [vmem:[#allocation5 + $0xd8] sm:$0xff]
    %v132 = vld [vmem:[#allocation5 + $0xe0] sm:$0xff]
    %v133 = vld [vmem:[#allocation5 + $0xe8] sm:$0xff]
    %v134 = vld [vmem:[#allocation5 + $0xf0] sm:$0xff]
    %v135 = vld [vmem:[#allocation5 + $0xf8] sm:$0xff]
    %v136 = vld [vmem:[#allocation5 + $0x100] sm:$0xff]
    %v137 = vld [vmem:[#allocation5 + $0x108] sm:$0xff]
    %v138 = vld [vmem:[#allocation5 + $0x110] sm:$0xff]
    %v139 = vld [vmem:[#allocation5 + $0x118] sm:$0xff]
    %v140 = vld [vmem:[#allocation5 + $0x120] sm:$0xff]
    %v141 = vld [vmem:[#allocation5 + $0x128] sm:$0xff]
    %v142 = vld [vmem:[#allocation5 + $0x130] sm:$0xff]
    %v143 = vld [vmem:[#allocation5 + $0x138] sm:$0xff]
    %v144 = vld [vmem:[#allocation5 + $0x140] sm:$0xff]
    %v145 = vld [vmem:[#allocation5 + $0x148] sm:$0xff]
    %v146 = vld [vmem:[#allocation5 + $0x150] sm:$0xff]
    %v147 = vld [vmem:[#allocation5 + $0x158] sm:$0xff]
    %v148 = vld [vmem:[#allocation5 + $0x160] sm:$0xff]
    %v149 = vld [vmem:[#allocation5 + $0x168] sm:$0xff]
    %v150 = vld [vmem:[#allocation5 + $0x170] sm:$0xff]
    %v151 = vld [vmem:[#allocation5 + $0x178] sm:$0xff]
    %v152 = vld [vmem:[#allocation5 + $0x180] sm:$0xff]
    %v153 = vld [vmem:[#allocation5 + $0x188] sm:$0xff]
    %v154 = vld [vmem:[#allocation5 + $0x190] sm:$0xff]
    %v155 = vld [vmem:[#allocation5 + $0x198] sm:$0xff]
    %v156 = vld [vmem:[#allocation5 + $0x1a0] sm:$0xff]
    %v157 = vld [vmem:[#allocation5 + $0x1a8] sm:$0xff]
    %v158 = vld [vmem:[#allocation5 + $0x1b0] sm:$0xff]
    %v159 = vld [vmem:[#allocation5 + $0x1b8] sm:$0xff]
    %v160 = vld [vmem:[#allocation5 + $0x1c0] sm:$0xff]
    %v161 = vld [vmem:[#allocation5 + $0x1c8] sm:$0xff]
    %v162 = vld [vmem:[#allocation5 + $0x1d0] sm:$0xff]
    %v163 = vld [vmem:[#allocation5 + $0x1d8] sm:$0xff]
    %v164 = vld [vmem:[#allocation5 + $0x1e0] sm:$0xff]
    %v165 = vld [vmem:[#allocation5 + $0x1e8] sm:$0xff]
    %v166 = vld [vmem:[#allocation5 + $0x1f0] sm:$0xff]
    %v167 = vld [vmem:[#allocation5 + $0x1f8] sm:$0xff]
    %168 = vmax.xlane.f32.xlu0 %v40
    %v169 = vpop.xlane.xlu0 %168
    %170 = vmax.xlane.f32.xlu0 %v41
    %v171 = vpop.xlane.xlu0 %170
    %172 = vmax.xlane.f32.xlu0 %v42
    %v173 = vpop.xlane.xlu0 %172
    %174 = vmax.xlane.f32.xlu0 %v43
    %v175 = vpop.xlane.xlu0 %174
    %176 = vmax.xlane.f32.xlu0 %v44
    %v177 = vpop.xlane.xlu0 %176
    %178 = vmax.xlane.f32.xlu0 %v45
    %v179 = vpop.xlane.xlu0 %178
    %180 = vmax.xlane.f32.xlu0 %v46
    %v181 = vpop.xlane.xlu0 %180
    %182 = vmax.xlane.f32.xlu0 %v47
    %v183 = vpop.xlane.xlu0 %182
    %184 = vmax.xlane.f32.xlu0 %v48
    %v185 = vpop.xlane.xlu0 %184
    %186 = vmax.xlane.f32.xlu0 %v49
    %v187 = vpop.xlane.xlu0 %186
    %188 = vmax.xlane.f32.xlu0 %v50
    %v189 = vpop.xlane.xlu0 %188
    %190 = vmax.xlane.f32.xlu0 %v51
    %v191 = vpop.xlane.xlu0 %190
    %192 = vmax.xlane.f32.xlu0 %v52
    %v193 = vpop.xlane.xlu0 %192
    %194 = vmax.xlane.f32.xlu0 %v53
    %v195 = vpop.xlane.xlu0 %194
    %196 = vmax.xlane.f32.xlu0 %v54
    %v197 = vpop.xlane.xlu0 %196
    %198 = vmax.xlane.f32.xlu0 %v55
    %v199 = vpop.xlane.xlu0 %198
    %200 = vmax.xlane.f32.xlu0 %v56
    %v201 = vpop.xlane.xlu0 %200
    %202 = vmax.xlane.f32.xlu0 %v57
    %v203 = vpop.xlane.xlu0 %202
    %204 = vmax.xlane.f32.xlu0 %v58
    %v205 = vpop.xlane.xlu0 %204
    %206 = vmax.xlane.f32.xlu0 %v59
    %v207 = vpop.xlane.xlu0 %206
    %208 = vmax.xlane.f32.xlu0 %v60
    %v209 = vpop.xlane.xlu0 %208
    %210 = vmax.xlane.f32.xlu0 %v61
    %v211 = vpop.xlane.xlu0 %210
    %212 = vmax.xlane.f32.xlu0 %v62
    %v213 = vpop.xlane.xlu0 %212
    %214 = vmax.xlane.f32.xlu0 %v63
    %v215 = vpop.xlane.xlu0 %214
    %216 = vmax.xlane.f32.xlu0 %v64
    %v217 = vpop.xlane.xlu0 %216
    %218 = vmax.xlane.f32.xlu0 %v65
    %v219 = vpop.xlane.xlu0 %218
    %220 = vmax.xlane.f32.xlu0 %v66
    %v221 = vpop.xlane.xlu0 %220
    %222 = vmax.xlane.f32.xlu0 %v67
    %v223 = vpop.xlane.xlu0 %222
    %224 = vmax.xlane.f32.xlu0 %v68
    %v225 = vpop.xlane.xlu0 %224
    %226 = vmax.xlane.f32.xlu0 %v69
    %v227 = vpop.xlane.xlu0 %226
    %228 = vmax.xlane.f32.xlu0 %v70
    %v229 = vpop.xlane.xlu0 %228
    %230 = vmax.xlane.f32.xlu0 %v71
    %v231 = vpop.xlane.xlu0 %230
    %232 = vmax.xlane.f32.xlu0 %v72
    %v233 = vpop.xlane.xlu0 %232
    %234 = vmax.xlane.f32.xlu0 %v73
    %v235 = vpop.xlane.xlu0 %234
    %236 = vmax.xlane.f32.xlu0 %v74
    %v237 = vpop.xlane.xlu0 %236
    %238 = vmax.xlane.f32.xlu0 %v75
    %v239 = vpop.xlane.xlu0 %238
    %240 = vmax.xlane.f32.xlu0 %v76
    %v241 = vpop.xlane.xlu0 %240
    %242 = vmax.xlane.f32.xlu0 %v77
    %v243 = vpop.xlane.xlu0 %242
    %244 = vmax.xlane.f32.xlu0 %v78
    %v245 = vpop.xlane.xlu0 %244
    %246 = vmax.xlane.f32.xlu0 %v79
    %v247 = vpop.xlane.xlu0 %246
    %248 = vmax.xlane.f32.xlu0 %v80
    %v249 = vpop.xlane.xlu0 %248
    %250 = vmax.xlane.f32.xlu0 %v81
    %v251 = vpop.xlane.xlu0 %250
    %252 = vmax.xlane.f32.xlu0 %v82
    %v253 = vpop.xlane.xlu0 %252
    %254 = vmax.xlane.f32.xlu0 %v83
    %v255 = vpop.xlane.xlu0 %254
    %256 = vmax.xlane.f32.xlu0 %v84
    %v257 = vpop.xlane.xlu0 %256
    %258 = vmax.xlane.f32.xlu0 %v85
    %v259 = vpop.xlane.xlu0 %258
    %260 = vmax.xlane.f32.xlu0 %v86
    %v261 = vpop.xlane.xlu0 %260
    %262 = vmax.xlane.f32.xlu0 %v87
    %v263 = vpop.xlane.xlu0 %262
    %264 = vmax.xlane.f32.xlu0 %v88
    %v265 = vpop.xlane.xlu0 %264
    %266 = vmax.xlane.f32.xlu0 %v89
    %v267 = vpop.xlane.xlu0 %266
    %268 = vmax.xlane.f32.xlu0 %v90
    %v269 = vpop.xlane.xlu0 %268
    %270 = vmax.xlane.f32.xlu0 %v91
    %v271 = vpop.xlane.xlu0 %270
    %272 = vmax.xlane.f32.xlu0 %v92
    %v273 = vpop.xlane.xlu0 %272
    %274 = vmax.xlane.f32.xlu0 %v93
    %v275 = vpop.xlane.xlu0 %274
    %276 = vmax.xlane.f32.xlu0 %v94
    %v277 = vpop.xlane.xlu0 %276
    %278 = vmax.xlane.f32.xlu0 %v95
    %v279 = vpop.xlane.xlu0 %278
    %280 = vmax.xlane.f32.xlu0 %v96
    %v281 = vpop.xlane.xlu0 %280
    %282 = vmax.xlane.f32.xlu0 %v97
    %v283 = vpop.xlane.xlu0 %282
    %284 = vmax.xlane.f32.xlu0 %v98
    %v285 = vpop.xlane.xlu0 %284
    %286 = vmax.xlane.f32.xlu0 %v99
    %v287 = vpop.xlane.xlu0 %286
    %288 = vmax.xlane.f32.xlu0 %v100
    %v289 = vpop.xlane.xlu0 %288
    %290 = vmax.xlane.f32.xlu0 %v101
    %v291 = vpop.xlane.xlu0 %290
    %292 = vmax.xlane.f32.xlu0 %v102
    %v293 = vpop.xlane.xlu0 %292
    %294 = vmax.xlane.f32.xlu0 %v103
    %v295 = vpop.xlane.xlu0 %294
    %v296 = vsub.f32 %v40, %v169
    %v297 = vsub.f32 %v41, %v171
    %v298 = vsub.f32 %v42, %v173
    %v299 = vsub.f32 %v43, %v175
    %v300 = vsub.f32 %v44, %v177
    %v301 = vsub.f32 %v45, %v179
    %v302 = vsub.f32 %v46, %v181
    %v303 = vsub.f32 %v47, %v183
    %v304 = vsub.f32 %v48, %v185
    %v305 = vsub.f32 %v49, %v187
    %v306 = vsub.f32 %v50, %v189
    %v307 = vsub.f32 %v51, %v191
    %v308 = vsub.f32 %v52, %v193
    %v309 = vsub.f32 %v53, %v195
    %v310 = vsub.f32 %v54, %v197
    %v311 = vsub.f32 %v55, %v199
    %v312 = vsub.f32 %v56, %v201
    %v313 = vsub.f32 %v57, %v203
    %v314 = vsub.f32 %v58, %v205
    %v315 = vsub.f32 %v59, %v207
    %v316 = vsub.f32 %v60, %v209
    %v317 = vsub.f32 %v61, %v211
    %v318 = vsub.f32 %v62, %v213
    %v319 = vsub.f32 %v63, %v215
    %v320 = vsub.f32 %v64, %v217
    %v321 = vsub.f32 %v65, %v219
    %v322 = vsub.f32 %v66, %v221
    %v323 = vsub.f32 %v67, %v223
    %v324 = vsub.f32 %v68, %v225
    %v325 = vsub.f32 %v69, %v227
    %v326 = vsub.f32 %v70, %v229
    %v327 = vsub.f32 %v71, %v231
    %v328 = vsub.f32 %v72, %v233
    %v329 = vsub.f32 %v73, %v235
    %v330 = vsub.f32 %v74, %v237
    %v331 = vsub.f32 %v75, %v239
    %v332 = vsub.f32 %v76, %v241
    %v333 = vsub.f32 %v77, %v243
    %v334 = vsub.f32 %v78, %v245
    %v335 = vsub.f32 %v79, %v247
    %v336 = vsub.f32 %v80, %v249
    %v337 = vsub.f32 %v81, %v251
    %v338 = vsub.f32 %v82, %v253
    %v339 = vsub.f32 %v83, %v255
    %v340 = vsub.f32 %v84, %v257
    %v341 = vsub.f32 %v85, %v259
    %v342 = vsub.f32 %v86, %v261
    %v343 = vsub.f32 %v87, %v263
    %v344 = vsub.f32 %v88, %v265
    %v345 = vsub.f32 %v89, %v267
    %v346 = vsub.f32 %v90, %v269
    %v347 = vsub.f32 %v91, %v271
    %v348 = vsub.f32 %v92, %v273
    %v349 = vsub.f32 %v93, %v275
    %v350 = vsub.f32 %v94, %v277
    %v351 = vsub.f32 %v95, %v279
    %v352 = vsub.f32 %v96, %v281
    %v353 = vsub.f32 %v97, %v283
    %v354 = vsub.f32 %v98, %v285
    %v355 = vsub.f32 %v99, %v287
    %v356 = vsub.f32 %v100, %v289
    %v357 = vsub.f32 %v101, %v291
    %v358 = vsub.f32 %v102, %v293
    %v359 = vsub.f32 %v103, %v295
    %v360 = vmul.f32 %v296, 1.442695
    %v361 = vpow.pop %v360
    %v362 = vmul.f32 %v297, 1.442695
    %v363 = vpow.pop %v362
    %v364 = vmul.f32 %v298, 1.442695
    %v365 = vpow.pop %v364
    %v366 = vmul.f32 %v299, 1.442695
    %v367 = vpow.pop %v366
    %v368 = vmul.f32 %v300, 1.442695
    %v369 = vpow.pop %v368
    %v370 = vmul.f32 %v301, 1.442695
    %v371 = vpow.pop %v370
    %v372 = vmul.f32 %v302, 1.442695
    %v373 = vpow.pop %v372
    %v374 = vmul.f32 %v303, 1.442695
    %v375 = vpow.pop %v374
    %v376 = vmul.f32 %v304, 1.442695
    %v377 = vpow.pop %v376
    %v378 = vmul.f32 %v305, 1.442695
    %v379 = vpow.pop %v378
    %v380 = vmul.f32 %v306, 1.442695
    %v381 = vpow.pop %v380
    %v382 = vmul.f32 %v307, 1.442695
    %v383 = vpow.pop %v382
    %v384 = vmul.f32 %v308, 1.442695
    %v385 = vpow.pop %v384
    %v386 = vmul.f32 %v309, 1.442695
    %v387 = vpow.pop %v386
    %v388 = vmul.f32 %v310, 1.442695
    %v389 = vpow.pop %v388
    %v390 = vmul.f32 %v311, 1.442695
    %v391 = vpow.pop %v390
    %v392 = vmul.f32 %v312, 1.442695
    %v393 = vpow.pop %v392
    %v394 = vmul.f32 %v313, 1.442695
    %v395 = vpow.pop %v394
    %v396 = vmul.f32 %v314, 1.442695
    %v397 = vpow.pop %v396
    %v398 = vmul.f32 %v315, 1.442695
    %v399 = vpow.pop %v398
    %v400 = vmul.f32 %v316, 1.442695
    %v401 = vpow.pop %v400
    %v402 = vmul.f32 %v317, 1.442695
    %v403 = vpow.pop %v402
    %v404 = vmul.f32 %v318, 1.442695
    %v405 = vpow.pop %v404
    %v406 = vmul.f32 %v319, 1.442695
    %v407 = vpow.pop %v406
    %v408 = vmul.f32 %v320, 1.442695
    %v409 = vpow.pop %v408
    %v410 = vmul.f32 %v321, 1.442695
    %v411 = vpow.pop %v410
    %v412 = vmul.f32 %v322, 1.442695
    %v413 = vpow.pop %v412
    %v414 = vmul.f32 %v323, 1.442695
    %v415 = vpow.pop %v414
    %v416 = vmul.f32 %v324, 1.442695
    %v417 = vpow.pop %v416
    %v418 = vmul.f32 %v325, 1.442695
    %v419 = vpow.pop %v418
    %v420 = vmul.f32 %v326, 1.442695
    %v421 = vpow.pop %v420
    %v422 = vmul.f32 %v327, 1.442695
    %v423 = vpow.pop %v422
    %v424 = vmul.f32 %v328, 1.442695
    %v425 = vpow.pop %v424
    %v426 = vmul.f32 %v329, 1.442695
    %v427 = vpow.pop %v426
    %v428 = vmul.f32 %v330, 1.442695
    %v429 = vpow.pop %v428
    %v430 = vmul.f32 %v331, 1.442695
    %v431 = vpow.pop %v430
    %v432 = vmul.f32 %v332, 1.442695
    %v433 = vpow.pop %v432
    %v434 = vmul.f32 %v333, 1.442695
    %v435 = vpow.pop %v434
    %v436 = vmul.f32 %v334, 1.442695
    %v437 = vpow.pop %v436
    %v438 = vmul.f32 %v335, 1.442695
    %v439 = vpow.pop %v438
    %v440 = vmul.f32 %v336, 1.442695
    %v441 = vpow.pop %v440
    %v442 = vmul.f32 %v337, 1.442695
    %v443 = vpow.pop %v442
    %v444 = vmul.f32 %v338, 1.442695
    %v445 = vpow.pop %v444
    %v446 = vmul.f32 %v339, 1.442695
    %v447 = vpow.pop %v446
    %v448 = vmul.f32 %v340, 1.442695
    %v449 = vpow.pop %v448
    %v450 = vmul.f32 %v341, 1.442695
    %v451 = vpow.pop %v450
    %v452 = vmul.f32 %v342, 1.442695
    %v453 = vpow.pop %v452
    %v454 = vmul.f32 %v343, 1.442695
    %v455 = vpow.pop %v454
    %v456 = vmul.f32 %v344, 1.442695
    %v457 = vpow.pop %v456
    %v458 = vmul.f32 %v345, 1.442695
    %v459 = vpow.pop %v458
    %v460 = vmul.f32 %v346, 1.442695
    %v461 = vpow.pop %v460
    %v462 = vmul.f32 %v347, 1.442695
    %v463 = vpow.pop %v462
    %v464 = vmul.f32 %v348, 1.442695
    %v465 = vpow.pop %v464
    %v466 = vmul.f32 %v349, 1.442695
    %v467 = vpow.pop %v466
    %v468 = vmul.f32 %v350, 1.442695
    %v469 = vpow.pop %v468
    %v470 = vmul.f32 %v351, 1.442695
    %v471 = vpow.pop %v470
    %v472 = vmul.f32 %v352, 1.442695
    %v473 = vpow.pop %v472
    %v474 = vmul.f32 %v353, 1.442695
    %v475 = vpow.pop %v474
    %v476 = vmul.f32 %v354, 1.442695
    %v477 = vpow.pop %v476
    %v478 = vmul.f32 %v355, 1.442695
    %v479 = vpow.pop %v478
    %v480 = vmul.f32 %v356, 1.442695
    %v481 = vpow.pop %v480
    %v482 = vmul.f32 %v357, 1.442695
    %v483 = vpow.pop %v482
    %v484 = vmul.f32 %v358, 1.442695
    %v485 = vpow.pop %v484
    %v486 = vmul.f32 %v359, 1.442695
    %v487 = vpow.pop %v486
    %488 = vadd.xlane.f32.xlu0 %v361
    %v489 = vpop.xlane.xlu0 %488
    %490 = vadd.xlane.f32.xlu0 %v363
    %v491 = vpop.xlane.xlu0 %490
    %492 = vadd.xlane.f32.xlu0 %v365
    %v493 = vpop.xlane.xlu0 %492
    %494 = vadd.xlane.f32.xlu0 %v367
    %v495 = vpop.xlane.xlu0 %494
    %496 = vadd.xlane.f32.xlu0 %v369
    %v497 = vpop.xlane.xlu0 %496
    %498 = vadd.xlane.f32.xlu0 %v371
    %v499 = vpop.xlane.xlu0 %498
    %500 = vadd.xlane.f32.xlu0 %v373
    %v501 = vpop.xlane.xlu0 %500
    %502 = vadd.xlane.f32.xlu0 %v375
    %v503 = vpop.xlane.xlu0 %502
    %504 = vadd.xlane.f32.xlu0 %v377
    %v505 = vpop.xlane.xlu0 %504
    %506 = vadd.xlane.f32.xlu0 %v379
    %v507 = vpop.xlane.xlu0 %506
    %508 = vadd.xlane.f32.xlu0 %v381
    %v509 = vpop.xlane.xlu0 %508
    %510 = vadd.xlane.f32.xlu0 %v383
    %v511 = vpop.xlane.xlu0 %510
    %512 = vadd.xlane.f32.xlu0 %v385
    %v513 = vpop.xlane.xlu0 %512
    %514 = vadd.xlane.f32.xlu0 %v387
    %v515 = vpop.xlane.xlu0 %514
    %516 = vadd.xlane.f32.xlu0 %v389
    %v517 = vpop.xlane.xlu0 %516
    %518 = vadd.xlane.f32.xlu0 %v391
    %v519 = vpop.xlane.xlu0 %518
    %520 = vadd.xlane.f32.xlu0 %v393
    %v521 = vpop.xlane.xlu0 %520
    %522 = vadd.xlane.f32.xlu0 %v395
    %v523 = vpop.xlane.xlu0 %522
    %524 = vadd.xlane.f32.xlu0 %v397
    %v525 = vpop.xlane.xlu0 %524
    %526 = vadd.xlane.f32.xlu0 %v399
    %v527 = vpop.xlane.xlu0 %526
    %528 = vadd.xlane.f32.xlu0 %v401
    %v529 = vpop.xlane.xlu0 %528
    %530 = vadd.xlane.f32.xlu0 %v403
    %v531 = vpop.xlane.xlu0 %530
    %532 = vadd.xlane.f32.xlu0 %v405
    %v533 = vpop.xlane.xlu0 %532
    %534 = vadd.xlane.f32.xlu0 %v407
    %v535 = vpop.xlane.xlu0 %534
    %536 = vadd.xlane.f32.xlu0 %v409
    %v537 = vpop.xlane.xlu0 %536
    %538 = vadd.xlane.f32.xlu0 %v411
    %v539 = vpop.xlane.xlu0 %538
    %540 = vadd.xlane.f32.xlu0 %v413
    %v541 = vpop.xlane.xlu0 %540
    %542 = vadd.xlane.f32.xlu0 %v415
    %v543 = vpop.xlane.xlu0 %542
    %544 = vadd.xlane.f32.xlu0 %v417
    %v545 = vpop.xlane.xlu0 %544
    %546 = vadd.xlane.f32.xlu0 %v419
    %v547 = vpop.xlane.xlu0 %546
    %548 = vadd.xlane.f32.xlu0 %v421
    %v549 = vpop.xlane.xlu0 %548
    %550 = vadd.xlane.f32.xlu0 %v423
    %v551 = vpop.xlane.xlu0 %550
    %552 = vadd.xlane.f32.xlu0 %v425
    %v553 = vpop.xlane.xlu0 %552
    %554 = vadd.xlane.f32.xlu0 %v427
    %v555 = vpop.xlane.xlu0 %554
    %556 = vadd.xlane.f32.xlu0 %v429
    %v557 = vpop.xlane.xlu0 %556
    %558 = vadd.xlane.f32.xlu0 %v431
    %v559 = vpop.xlane.xlu0 %558
    %560 = vadd.xlane.f32.xlu0 %v433
    %v561 = vpop.xlane.xlu0 %560
    %562 = vadd.xlane.f32.xlu0 %v435
    %v563 = vpop.xlane.xlu0 %562
    %564 = vadd.xlane.f32.xlu0 %v437
    %v565 = vpop.xlane.xlu0 %564
    %566 = vadd.xlane.f32.xlu0 %v439
    %v567 = vpop.xlane.xlu0 %566
    %568 = vadd.xlane.f32.xlu0 %v441
    %v569 = vpop.xlane.xlu0 %568
    %570 = vadd.xlane.f32.xlu0 %v443
    %v571 = vpop.xlane.xlu0 %570
    %572 = vadd.xlane.f32.xlu0 %v445
    %v573 = vpop.xlane.xlu0 %572
    %574 = vadd.xlane.f32.xlu0 %v447
    %v575 = vpop.xlane.xlu0 %574
    %576 = vadd.xlane.f32.xlu0 %v449
    %v577 = vpop.xlane.xlu0 %576
    %578 = vadd.xlane.f32.xlu0 %v451
    %v579 = vpop.xlane.xlu0 %578
    %580 = vadd.xlane.f32.xlu0 %v453
    %v581 = vpop.xlane.xlu0 %580
    %582 = vadd.xlane.f32.xlu0 %v455
    %v583 = vpop.xlane.xlu0 %582
    %584 = vadd.xlane.f32.xlu0 %v457
    %v585 = vpop.xlane.xlu0 %584
    %586 = vadd.xlane.f32.xlu0 %v459
    %v587 = vpop.xlane.xlu0 %586
    %588 = vadd.xlane.f32.xlu0 %v461
    %v589 = vpop.xlane.xlu0 %588
    %590 = vadd.xlane.f32.xlu0 %v463
    %v591 = vpop.xlane.xlu0 %590
    %592 = vadd.xlane.f32.xlu0 %v465
    %v593 = vpop.xlane.xlu0 %592
    %594 = vadd.xlane.f32.xlu0 %v467
    %v595 = vpop.xlane.xlu0 %594
    %596 = vadd.xlane.f32.xlu0 %v469
    %v597 = vpop.xlane.xlu0 %596
    %598 = vadd.xlane.f32.xlu0 %v471
    %v599 = vpop.xlane.xlu0 %598
    %600 = vadd.xlane.f32.xlu0 %v473
    %v601 = vpop.xlane.xlu0 %600
    %602 = vadd.xlane.f32.xlu0 %v475
    %v603 = vpop.xlane.xlu0 %602
    %604 = vadd.xlane.f32.xlu0 %v477
    %v605 = vpop.xlane.xlu0 %604
    %606 = vadd.xlane.f32.xlu0 %v479
    %v607 = vpop.xlane.xlu0 %606
    %608 = vadd.xlane.f32.xlu0 %v481
    %v609 = vpop.xlane.xlu0 %608
    %610 = vadd.xlane.f32.xlu0 %v483
    %v611 = vpop.xlane.xlu0 %610
    %612 = vadd.xlane.f32.xlu0 %v485
    %v613 = vpop.xlane.xlu0 %612
    %614 = vadd.xlane.f32.xlu0 %v487
    %v615 = vpop.xlane.xlu0 %614
    %v616 = vlog2.pop %v489
    %v617 = vmul.f32 %v616, 0.6931472
    %v618 = vlog2.pop %v491
    %v619 = vmul.f32 %v618, 0.6931472
    %v620 = vlog2.pop %v493
    %v621 = vmul.f32 %v620, 0.6931472
    %v622 = vlog2.pop %v495
    %v623 = vmul.f32 %v622, 0.6931472
    %v624 = vlog2.pop %v497
    %v625 = vmul.f32 %v624, 0.6931472
    %v626 = vlog2.pop %v499
    %v627 = vmul.f32 %v626, 0.6931472
    %v628 = vlog2.pop %v501
    %v629 = vmul.f32 %v628, 0.6931472
    %v630 = vlog2.pop %v503
    %v631 = vmul.f32 %v630, 0.6931472
    %v632 = vlog2.pop %v505
    %v633 = vmul.f32 %v632, 0.6931472
    %v634 = vlog2.pop %v507
    %v635 = vmul.f32 %v634, 0.6931472
    %v636 = vlog2.pop %v509
    %v637 = vmul.f32 %v636, 0.6931472
    %v638 = vlog2.pop %v511
    %v639 = vmul.f32 %v638, 0.6931472
    %v640 = vlog2.pop %v513
    %v641 = vmul.f32 %v640, 0.6931472
    %v642 = vlog2.pop %v515
    %v643 = vmul.f32 %v642, 0.6931472
    %v644 = vlog2.pop %v517
    %v645 = vmul.f32 %v644, 0.6931472
    %v646 = vlog2.pop %v519
    %v647 = vmul.f32 %v646, 0.6931472
    %v648 = vlog2.pop %v521
    %v649 = vmul.f32 %v648, 0.6931472
    %v650 = vlog2.pop %v523
    %v651 = vmul.f32 %v650, 0.6931472
    %v652 = vlog2.pop %v525
    %v653 = vmul.f32 %v652, 0.6931472
    %v654 = vlog2.pop %v527
    %v655 = vmul.f32 %v654, 0.6931472
    %v656 = vlog2.pop %v529
    %v657 = vmul.f32 %v656, 0.6931472
    %v658 = vlog2.pop %v531
    %v659 = vmul.f32 %v658, 0.6931472
    %v660 = vlog2.pop %v533
    %v661 = vmul.f32 %v660, 0.6931472
    %v662 = vlog2.pop %v535
    %v663 = vmul.f32 %v662, 0.6931472
    %v664 = vlog2.pop %v537
    %v665 = vmul.f32 %v664, 0.6931472
    %v666 = vlog2.pop %v539
    %v667 = vmul.f32 %v666, 0.6931472
    %v668 = vlog2.pop %v541
    %v669 = vmul.f32 %v668, 0.6931472
    %v670 = vlog2.pop %v543
    %v671 = vmul.f32 %v670, 0.6931472
    %v672 = vlog2.pop %v545
    %v673 = vmul.f32 %v672, 0.6931472
    %v674 = vlog2.pop %v547
    %v675 = vmul.f32 %v674, 0.6931472
    %v676 = vlog2.pop %v549
    %v677 = vmul.f32 %v676, 0.6931472
    %v678 = vlog2.pop %v551
    %v679 = vmul.f32 %v678, 0.6931472
    %v680 = vlog2.pop %v553
    %v681 = vmul.f32 %v680, 0.6931472
    %v682 = vlog2.pop %v555
    %v683 = vmul.f32 %v682, 0.6931472
    %v684 = vlog2.pop %v557
    %v685 = vmul.f32 %v684, 0.6931472
    %v686 = vlog2.pop %v559
    %v687 = vmul.f32 %v686, 0.6931472
    %v688 = vlog2.pop %v561
    %v689 = vmul.f32 %v688, 0.6931472
    %v690 = vlog2.pop %v563
    %v691 = vmul.f32 %v690, 0.6931472
    %v692 = vlog2.pop %v565
    %v693 = vmul.f32 %v692, 0.6931472
    %v694 = vlog2.pop %v567
    %v695 = vmul.f32 %v694, 0.6931472
    %v696 = vlog2.pop %v569
    %v697 = vmul.f32 %v696, 0.6931472
    %v698 = vlog2.pop %v571
    %v699 = vmul.f32 %v698, 0.6931472
    %v700 = vlog2.pop %v573
    %v701 = vmul.f32 %v700, 0.6931472
    %v702 = vlog2.pop %v575
    %v703 = vmul.f32 %v702, 0.6931472
    %v704 = vlog2.pop %v577
    %v705 = vmul.f32 %v704, 0.6931472
    %v706 = vlog2.pop %v579
    %v707 = vmul.f32 %v706, 0.6931472
    %v708 = vlog2.pop %v581
    %v709 = vmul.f32 %v708, 0.6931472
    %v710 = vlog2.pop %v583
    %v711 = vmul.f32 %v710, 0.6931472
    %v712 = vlog2.pop %v585
    %v713 = vmul.f32 %v712, 0.6931472
    %v714 = vlog2.pop %v587
    %v715 = vmul.f32 %v714, 0.6931472
    %v716 = vlog2.pop %v589
    %v717 = vmul.f32 %v716, 0.6931472
    %v718 = vlog2.pop %v591
    %v719 = vmul.f32 %v718, 0.6931472
    %v720 = vlog2.pop %v593
    %v721 = vmul.f32 %v720, 0.6931472
    %v722 = vlog2.pop %v595
    %v723 = vmul.f32 %v722, 0.6931472
    %v724 = vlog2.pop %v597
    %v725 = vmul.f32 %v724, 0.6931472
    %v726 = vlog2.pop %v599
    %v727 = vmul.f32 %v726, 0.6931472
    %v728 = vlog2.pop %v601
    %v729 = vmul.f32 %v728, 0.6931472
    %v730 = vlog2.pop %v603
    %v731 = vmul.f32 %v730, 0.6931472
    %v732 = vlog2.pop %v605
    %v733 = vmul.f32 %v732, 0.6931472
    %v734 = vlog2.pop %v607
    %v735 = vmul.f32 %v734, 0.6931472
    %v736 = vlog2.pop %v609
    %v737 = vmul.f32 %v736, 0.6931472
    %v738 = vlog2.pop %v611
    %v739 = vmul.f32 %v738, 0.6931472
    %v740 = vlog2.pop %v613
    %v741 = vmul.f32 %v740, 0.6931472
    %v742 = vlog2.pop %v615
    %v743 = vmul.f32 %v742, 0.6931472
    %v744 = vlaneseq
    %v745 = vand.u32 %v744, 127
    %746 = vset.pattern.permute.xlu0 0
    %747 = vperm.xlu0 %746, %v104
    %v748 = vpop.permute.xlu0 %747
    %749 = vset.pattern.permute.xlu0 0
    %750 = vperm.xlu0 %749, %v105
    %v751 = vpop.permute.xlu0 %750
    %752 = vset.pattern.permute.xlu0 0
    %753 = vperm.xlu0 %752, %v106
    %v754 = vpop.permute.xlu0 %753
    %755 = vset.pattern.permute.xlu0 0
    %756 = vperm.xlu0 %755, %v107
    %v757 = vpop.permute.xlu0 %756
    %758 = vset.pattern.permute.xlu0 0
    %759 = vperm.xlu0 %758, %v108
    %v760 = vpop.permute.xlu0 %759
    %761 = vset.pattern.permute.xlu0 0
    %762 = vperm.xlu0 %761, %v109
    %v763 = vpop.permute.xlu0 %762
    %764 = vset.pattern.permute.xlu0 0
    %765 = vperm.xlu0 %764, %v110
    %v766 = vpop.permute.xlu0 %765
    %767 = vset.pattern.permute.xlu0 0
    %768 = vperm.xlu0 %767, %v111
    %v769 = vpop.permute.xlu0 %768
    %770 = vset.pattern.permute.xlu0 0
    %771 = vperm.xlu0 %770, %v112
    %v772 = vpop.permute.xlu0 %771
    %773 = vset.pattern.permute.xlu0 0
    %774 = vperm.xlu0 %773, %v113
    %v775 = vpop.permute.xlu0 %774
    %776 = vset.pattern.permute.xlu0 0
    %777 = vperm.xlu0 %776, %v114
    %v778 = vpop.permute.xlu0 %777
    %779 = vset.pattern.permute.xlu0 0
    %780 = vperm.xlu0 %779, %v115
    %v781 = vpop.permute.xlu0 %780
    %782 = vset.pattern.permute.xlu0 0
    %783 = vperm.xlu0 %782, %v116
    %v784 = vpop.permute.xlu0 %783
    %785 = vset.pattern.permute.xlu0 0
    %786 = vperm.xlu0 %785, %v117
    %v787 = vpop.permute.xlu0 %786
    %788 = vset.pattern.permute.xlu0 0
    %789 = vperm.xlu0 %788, %v118
    %v790 = vpop.permute.xlu0 %789
    %791 = vset.pattern.permute.xlu0 0
    %792 = vperm.xlu0 %791, %v119
    %v793 = vpop.permute.xlu0 %792
    %794 = vset.pattern.permute.xlu0 0
    %795 = vperm.xlu0 %794, %v120
    %v796 = vpop.permute.xlu0 %795
    %797 = vset.pattern.permute.xlu0 0
    %798 = vperm.xlu0 %797, %v121
    %v799 = vpop.permute.xlu0 %798
    %800 = vset.pattern.permute.xlu0 0
    %801 = vperm.xlu0 %800, %v122
    %v802 = vpop.permute.xlu0 %801
    %803 = vset.pattern.permute.xlu0 0
    %804 = vperm.xlu0 %803, %v123
    %v805 = vpop.permute.xlu0 %804
    %806 = vset.pattern.permute.xlu0 0
    %807 = vperm.xlu0 %806, %v124
    %v808 = vpop.permute.xlu0 %807
    %809 = vset.pattern.permute.xlu0 0
    %810 = vperm.xlu0 %809, %v125
    %v811 = vpop.permute.xlu0 %810
    %812 = vset.pattern.permute.xlu0 0
    %813 = vperm.xlu0 %812, %v126
    %v814 = vpop.permute.xlu0 %813
    %815 = vset.pattern.permute.xlu0 0
    %816 = vperm.xlu0 %815, %v127
    %v817 = vpop.permute.xlu0 %816
    %818 = vset.pattern.permute.xlu0 0
    %819 = vperm.xlu0 %818, %v128
    %v820 = vpop.permute.xlu0 %819
    %821 = vset.pattern.permute.xlu0 0
    %822 = vperm.xlu0 %821, %v129
    %v823 = vpop.permute.xlu0 %822
    %824 = vset.pattern.permute.xlu0 0
    %825 = vperm.xlu0 %824, %v130
    %v826 = vpop.permute.xlu0 %825
    %827 = vset.pattern.permute.xlu0 0
    %828 = vperm.xlu0 %827, %v131
    %v829 = vpop.permute.xlu0 %828
    %830 = vset.pattern.permute.xlu0 0
    %831 = vperm.xlu0 %830, %v132
    %v832 = vpop.permute.xlu0 %831
    %833 = vset.pattern.permute.xlu0 0
    %834 = vperm.xlu0 %833, %v133
    %v835 = vpop.permute.xlu0 %834
    %836 = vset.pattern.permute.xlu0 0
    %837 = vperm.xlu0 %836, %v134
    %v838 = vpop.permute.xlu0 %837
    %839 = vset.pattern.permute.xlu0 0
    %840 = vperm.xlu0 %839, %v135
    %v841 = vpop.permute.xlu0 %840
    %842 = vset.pattern.permute.xlu0 0
    %843 = vperm.xlu0 %842, %v136
    %v844 = vpop.permute.xlu0 %843
    %845 = vset.pattern.permute.xlu0 0
    %846 = vperm.xlu0 %845, %v137
    %v847 = vpop.permute.xlu0 %846
    %848 = vset.pattern.permute.xlu0 0
    %849 = vperm.xlu0 %848, %v138
    %v850 = vpop.permute.xlu0 %849
    %851 = vset.pattern.permute.xlu0 0
    %852 = vperm.xlu0 %851, %v139
    %v853 = vpop.permute.xlu0 %852
    %854 = vset.pattern.permute.xlu0 0
    %855 = vperm.xlu0 %854, %v140
    %v856 = vpop.permute.xlu0 %855
    %857 = vset.pattern.permute.xlu0 0
    %858 = vperm.xlu0 %857, %v141
    %v859 = vpop.permute.xlu0 %858
    %860 = vset.pattern.permute.xlu0 0
    %861 = vperm.xlu0 %860, %v142
    %v862 = vpop.permute.xlu0 %861
    %863 = vset.pattern.permute.xlu0 0
    %864 = vperm.xlu0 %863, %v143
    %v865 = vpop.permute.xlu0 %864
    %866 = vset.pattern.permute.xlu0 0
    %867 = vperm.xlu0 %866, %v144
    %v868 = vpop.permute.xlu0 %867
    %869 = vset.pattern.permute.xlu0 0
    %870 = vperm.xlu0 %869, %v145
    %v871 = vpop.permute.xlu0 %870
    %872 = vset.pattern.permute.xlu0 0
    %873 = vperm.xlu0 %872, %v146
    %v874 = vpop.permute.xlu0 %873
    %875 = vset.pattern.permute.xlu0 0
    %876 = vperm.xlu0 %875, %v147
    %v877 = vpop.permute.xlu0 %876
    %878 = vset.pattern.permute.xlu0 0
    %879 = vperm.xlu0 %878, %v148
    %v880 = vpop.permute.xlu0 %879
    %881 = vset.pattern.permute.xlu0 0
    %882 = vperm.xlu0 %881, %v149
    %v883 = vpop.permute.xlu0 %882
    %884 = vset.pattern.permute.xlu0 0
    %885 = vperm.xlu0 %884, %v150
    %v886 = vpop.permute.xlu0 %885
    %887 = vset.pattern.permute.xlu0 0
    %888 = vperm.xlu0 %887, %v151
    %v889 = vpop.permute.xlu0 %888
    %890 = vset.pattern.permute.xlu0 0
    %891 = vperm.xlu0 %890, %v152
    %v892 = vpop.permute.xlu0 %891
    %893 = vset.pattern.permute.xlu0 0
    %894 = vperm.xlu0 %893, %v153
    %v895 = vpop.permute.xlu0 %894
    %896 = vset.pattern.permute.xlu0 0
    %897 = vperm.xlu0 %896, %v154
    %v898 = vpop.permute.xlu0 %897
    %899 = vset.pattern.permute.xlu0 0
    %900 = vperm.xlu0 %899, %v155
    %v901 = vpop.permute.xlu0 %900
    %902 = vset.pattern.permute.xlu0 0
    %903 = vperm.xlu0 %902, %v156
    %v904 = vpop.permute.xlu0 %903
    %905 = vset.pattern.permute.xlu0 0
    %906 = vperm.xlu0 %905, %v157
    %v907 = vpop.permute.xlu0 %906
    %908 = vset.pattern.permute.xlu0 0
    %909 = vperm.xlu0 %908, %v158
    %v910 = vpop.permute.xlu0 %909
    %911 = vset.pattern.permute.xlu0 0
    %912 = vperm.xlu0 %911, %v159
    %v913 = vpop.permute.xlu0 %912
    %914 = vset.pattern.permute.xlu0 0
    %915 = vperm.xlu0 %914, %v160
    %v916 = vpop.permute.xlu0 %915
    %917 = vset.pattern.permute.xlu0 0
    %918 = vperm.xlu0 %917, %v161
    %v919 = vpop.permute.xlu0 %918
    %920 = vset.pattern.permute.xlu0 0
    %921 = vperm.xlu0 %920, %v162
    %v922 = vpop.permute.xlu0 %921
    %923 = vset.pattern.permute.xlu0 0
    %924 = vperm.xlu0 %923, %v163
    %v925 = vpop.permute.xlu0 %924
    %926 = vset.pattern.permute.xlu0 0
    %927 = vperm.xlu0 %926, %v164
    %v928 = vpop.permute.xlu0 %927
    %929 = vset.pattern.permute.xlu0 0
    %930 = vperm.xlu0 %929, %v165
    %v931 = vpop.permute.xlu0 %930
    %932 = vset.pattern.permute.xlu0 0
    %933 = vperm.xlu0 %932, %v166
    %v934 = vpop.permute.xlu0 %933
    %935 = vset.pattern.permute.xlu0 0
    %936 = vperm.xlu0 %935, %v167
    %v937 = vpop.permute.xlu0 %936
    %vm938 = vcmp.eq.s32.totalorder %v745, %v748
    %vm939 = vcmp.eq.s32.totalorder %v745, %v751
    %vm940 = vcmp.eq.s32.totalorder %v745, %v754
    %vm941 = vcmp.eq.s32.totalorder %v745, %v757
    %vm942 = vcmp.eq.s32.totalorder %v745, %v760
    %vm943 = vcmp.eq.s32.totalorder %v745, %v763
    %vm944 = vcmp.eq.s32.totalorder %v745, %v766
    %vm945 = vcmp.eq.s32.totalorder %v745, %v769
    %vm946 = vcmp.eq.s32.totalorder %v745, %v772
    %vm947 = vcmp.eq.s32.totalorder %v745, %v775
    %vm948 = vcmp.eq.s32.totalorder %v745, %v778
    %vm949 = vcmp.eq.s32.totalorder %v745, %v781
    %vm950 = vcmp.eq.s32.totalorder %v745, %v784
    %vm951 = vcmp.eq.s32.totalorder %v745, %v787
    %vm952 = vcmp.eq.s32.totalorder %v745, %v790
    %vm953 = vcmp.eq.s32.totalorder %v745, %v793
    %vm954 = vcmp.eq.s32.totalorder %v745, %v796
    %vm955 = vcmp.eq.s32.totalorder %v745, %v799
    %vm956 = vcmp.eq.s32.totalorder %v745, %v802
    %vm957 = vcmp.eq.s32.totalorder %v745, %v805
    %vm958 = vcmp.eq.s32.totalorder %v745, %v808
    %vm959 = vcmp.eq.s32.totalorder %v745, %v811
    %vm960 = vcmp.eq.s32.totalorder %v745, %v814
    %vm961 = vcmp.eq.s32.totalorder %v745, %v817
    %vm962 = vcmp.eq.s32.totalorder %v745, %v820
    %vm963 = vcmp.eq.s32.totalorder %v745, %v823
    %vm964 = vcmp.eq.s32.totalorder %v745, %v826
    %vm965 = vcmp.eq.s32.totalorder %v745, %v829
    %vm966 = vcmp.eq.s32.totalorder %v745, %v832
    %vm967 = vcmp.eq.s32.totalorder %v745, %v835
    %vm968 = vcmp.eq.s32.totalorder %v745, %v838
    %vm969 = vcmp.eq.s32.totalorder %v745, %v841
    %vm970 = vcmp.eq.s32.totalorder %v745, %v844
    %vm971 = vcmp.eq.s32.totalorder %v745, %v847
    %vm972 = vcmp.eq.s32.totalorder %v745, %v850
    %vm973 = vcmp.eq.s32.totalorder %v745, %v853
    %vm974 = vcmp.eq.s32.totalorder %v745, %v856
    %vm975 = vcmp.eq.s32.totalorder %v745, %v859
    %vm976 = vcmp.eq.s32.totalorder %v745, %v862
    %vm977 = vcmp.eq.s32.totalorder %v745, %v865
    %vm978 = vcmp.eq.s32.totalorder %v745, %v868
    %vm979 = vcmp.eq.s32.totalorder %v745, %v871
    %vm980 = vcmp.eq.s32.totalorder %v745, %v874
    %vm981 = vcmp.eq.s32.totalorder %v745, %v877
    %vm982 = vcmp.eq.s32.totalorder %v745, %v880
    %vm983 = vcmp.eq.s32.totalorder %v745, %v883
    %vm984 = vcmp.eq.s32.totalorder %v745, %v886
    %vm985 = vcmp.eq.s32.totalorder %v745, %v889
    %vm986 = vcmp.eq.s32.totalorder %v745, %v892
    %vm987 = vcmp.eq.s32.totalorder %v745, %v895
    %vm988 = vcmp.eq.s32.totalorder %v745, %v898
    %vm989 = vcmp.eq.s32.totalorder %v745, %v901
    %vm990 = vcmp.eq.s32.totalorder %v745, %v904
    %vm991 = vcmp.eq.s32.totalorder %v745, %v907
    %vm992 = vcmp.eq.s32.totalorder %v745, %v910
    %vm993 = vcmp.eq.s32.totalorder %v745, %v913
    %vm994 = vcmp.eq.s32.totalorder %v745, %v916
    %vm995 = vcmp.eq.s32.totalorder %v745, %v919
    %vm996 = vcmp.eq.s32.totalorder %v745, %v922
    %vm997 = vcmp.eq.s32.totalorder %v745, %v925
    %vm998 = vcmp.eq.s32.totalorder %v745, %v928
    %vm999 = vcmp.eq.s32.totalorder %v745, %v931
    %vm1000 = vcmp.eq.s32.totalorder %v745, %v934
    %vm1001 = vcmp.eq.s32.totalorder %v745, %v937
    %v1002 = vsel %vm938, %v40, 0.0
    %v1003 = vsel %vm939, %v41, 0.0
    %v1004 = vsel %vm940, %v42, 0.0
    %v1005 = vsel %vm941, %v43, 0.0
    %v1006 = vsel %vm942, %v44, 0.0
    %v1007 = vsel %vm943, %v45, 0.0
    %v1008 = vsel %vm944, %v46, 0.0
    %v1009 = vsel %vm945, %v47, 0.0
    %v1010 = vsel %vm946, %v48, 0.0
    %v1011 = vsel %vm947, %v49, 0.0
    %v1012 = vsel %vm948, %v50, 0.0
    %v1013 = vsel %vm949, %v51, 0.0
    %v1014 = vsel %vm950, %v52, 0.0
    %v1015 = vsel %vm951, %v53, 0.0
    %v1016 = vsel %vm952, %v54, 0.0
    %v1017 = vsel %vm953, %v55, 0.0
    %v1018 = vsel %vm954, %v56, 0.0
    %v1019 = vsel %vm955, %v57, 0.0
    %v1020 = vsel %vm956, %v58, 0.0
    %v1021 = vsel %vm957, %v59, 0.0
    %v1022 = vsel %vm958, %v60, 0.0
    %v1023 = vsel %vm959, %v61, 0.0
    %v1024 = vsel %vm960, %v62, 0.0
    %v1025 = vsel %vm961, %v63, 0.0
    %v1026 = vsel %vm962, %v64, 0.0
    %v1027 = vsel %vm963, %v65, 0.0
    %v1028 = vsel %vm964, %v66, 0.0
    %v1029 = vsel %vm965, %v67, 0.0
    %v1030 = vsel %vm966, %v68, 0.0
    %v1031 = vsel %vm967, %v69, 0.0
    %v1032 = vsel %vm968, %v70, 0.0
    %v1033 = vsel %vm969, %v71, 0.0
    %v1034 = vsel %vm970, %v72, 0.0
    %v1035 = vsel %vm971, %v73, 0.0
    %v1036 = vsel %vm972, %v74, 0.0
    %v1037 = vsel %vm973, %v75, 0.0
    %v1038 = vsel %vm974, %v76, 0.0
    %v1039 = vsel %vm975, %v77, 0.0
    %v1040 = vsel %vm976, %v78, 0.0
    %v1041 = vsel %vm977, %v79, 0.0
    %v1042 = vsel %vm978, %v80, 0.0
    %v1043 = vsel %vm979, %v81, 0.0
    %v1044 = vsel %vm980, %v82, 0.0
    %v1045 = vsel %vm981, %v83, 0.0
    %v1046 = vsel %vm982, %v84, 0.0
    %v1047 = vsel %vm983, %v85, 0.0
    %v1048 = vsel %vm984, %v86, 0.0
    %v1049 = vsel %vm985, %v87, 0.0
    %v1050 = vsel %vm986, %v88, 0.0
    %v1051 = vsel %vm987, %v89, 0.0
    %v1052 = vsel %vm988, %v90, 0.0
    %v1053 = vsel %vm989, %v91, 0.0
    %v1054 = vsel %vm990, %v92, 0.0
    %v1055 = vsel %vm991, %v93, 0.0
    %v1056 = vsel %vm992, %v94, 0.0
    %v1057 = vsel %vm993, %v95, 0.0
    %v1058 = vsel %vm994, %v96, 0.0
    %v1059 = vsel %vm995, %v97, 0.0
    %v1060 = vsel %vm996, %v98, 0.0
    %v1061 = vsel %vm997, %v99, 0.0
    %v1062 = vsel %vm998, %v100, 0.0
    %v1063 = vsel %vm999, %v101, 0.0
    %v1064 = vsel %vm1000, %v102, 0.0
    %v1065 = vsel %vm1001, %v103, 0.0
    %1066 = vadd.xlane.f32.xlu0 %v1002
    %v1067 = vpop.xlane.xlu0 %1066
    %1068 = vadd.xlane.f32.xlu0 %v1003
    %v1069 = vpop.xlane.xlu0 %1068
    %1070 = vadd.xlane.f32.xlu0 %v1004
    %v1071 = vpop.xlane.xlu0 %1070
    %1072 = vadd.xlane.f32.xlu0 %v1005
    %v1073 = vpop.xlane.xlu0 %1072
    %1074 = vadd.xlane.f32.xlu0 %v1006
    %v1075 = vpop.xlane.xlu0 %1074
    %1076 = vadd.xlane.f32.xlu0 %v1007
    %v1077 = vpop.xlane.xlu0 %1076
    %1078 = vadd.xlane.f32.xlu0 %v1008
    %v1079 = vpop.xlane.xlu0 %1078
    %1080 = vadd.xlane.f32.xlu0 %v1009
    %v1081 = vpop.xlane.xlu0 %1080
    %1082 = vadd.xlane.f32.xlu0 %v1010
    %v1083 = vpop.xlane.xlu0 %1082
    %1084 = vadd.xlane.f32.xlu0 %v1011
    %v1085 = vpop.xlane.xlu0 %1084
    %1086 = vadd.xlane.f32.xlu0 %v1012
    %v1087 = vpop.xlane.xlu0 %1086
    %1088 = vadd.xlane.f32.xlu0 %v1013
    %v1089 = vpop.xlane.xlu0 %1088
    %1090 = vadd.xlane.f32.xlu0 %v1014
    %v1091 = vpop.xlane.xlu0 %1090
    %1092 = vadd.xlane.f32.xlu0 %v1015
    %v1093 = vpop.xlane.xlu0 %1092
    %1094 = vadd.xlane.f32.xlu0 %v1016
    %v1095 = vpop.xlane.xlu0 %1094
    %1096 = vadd.xlane.f32.xlu0 %v1017
    %v1097 = vpop.xlane.xlu0 %1096
    %1098 = vadd.xlane.f32.xlu0 %v1018
    %v1099 = vpop.xlane.xlu0 %1098
    %1100 = vadd.xlane.f32.xlu0 %v1019
    %v1101 = vpop.xlane.xlu0 %1100
    %1102 = vadd.xlane.f32.xlu0 %v1020
    %v1103 = vpop.xlane.xlu0 %1102
    %1104 = vadd.xlane.f32.xlu0 %v1021
    %v1105 = vpop.xlane.xlu0 %1104
    %1106 = vadd.xlane.f32.xlu0 %v1022
    %v1107 = vpop.xlane.xlu0 %1106
    %1108 = vadd.xlane.f32.xlu0 %v1023
    %v1109 = vpop.xlane.xlu0 %1108
    %1110 = vadd.xlane.f32.xlu0 %v1024
    %v1111 = vpop.xlane.xlu0 %1110
    %1112 = vadd.xlane.f32.xlu0 %v1025
    %v1113 = vpop.xlane.xlu0 %1112
    %1114 = vadd.xlane.f32.xlu0 %v1026
    %v1115 = vpop.xlane.xlu0 %1114
    %1116 = vadd.xlane.f32.xlu0 %v1027
    %v1117 = vpop.xlane.xlu0 %1116
    %1118 = vadd.xlane.f32.xlu0 %v1028
    %v1119 = vpop.xlane.xlu0 %1118
    %1120 = vadd.xlane.f32.xlu0 %v1029
    %v1121 = vpop.xlane.xlu0 %1120
    %1122 = vadd.xlane.f32.xlu0 %v1030
    %v1123 = vpop.xlane.xlu0 %1122
    %1124 = vadd.xlane.f32.xlu0 %v1031
    %v1125 = vpop.xlane.xlu0 %1124
    %1126 = vadd.xlane.f32.xlu0 %v1032
    %v1127 = vpop.xlane.xlu0 %1126
    %1128 = vadd.xlane.f32.xlu0 %v1033
    %v1129 = vpop.xlane.xlu0 %1128
    %1130 = vadd.xlane.f32.xlu0 %v1034
    %v1131 = vpop.xlane.xlu0 %1130
    %1132 = vadd.xlane.f32.xlu0 %v1035
    %v1133 = vpop.xlane.xlu0 %1132
    %1134 = vadd.xlane.f32.xlu0 %v1036
    %v1135 = vpop.xlane.xlu0 %1134
    %1136 = vadd.xlane.f32.xlu0 %v1037
    %v1137 = vpop.xlane.xlu0 %1136
    %1138 = vadd.xlane.f32.xlu0 %v1038
    %v1139 = vpop.xlane.xlu0 %1138
    %1140 = vadd.xlane.f32.xlu0 %v1039
    %v1141 = vpop.xlane.xlu0 %1140
    %1142 = vadd.xlane.f32.xlu0 %v1040
    %v1143 = vpop.xlane.xlu0 %1142
    %1144 = vadd.xlane.f32.xlu0 %v1041
    %v1145 = vpop.xlane.xlu0 %1144
    %1146 = vadd.xlane.f32.xlu0 %v1042
    %v1147 = vpop.xlane.xlu0 %1146
    %1148 = vadd.xlane.f32.xlu0 %v1043
    %v1149 = vpop.xlane.xlu0 %1148
    %1150 = vadd.xlane.f32.xlu0 %v1044
    %v1151 = vpop.xlane.xlu0 %1150
    %1152 = vadd.xlane.f32.xlu0 %v1045
    %v1153 = vpop.xlane.xlu0 %1152
    %1154 = vadd.xlane.f32.xlu0 %v1046
    %v1155 = vpop.xlane.xlu0 %1154
    %1156 = vadd.xlane.f32.xlu0 %v1047
    %v1157 = vpop.xlane.xlu0 %1156
    %1158 = vadd.xlane.f32.xlu0 %v1048
    %v1159 = vpop.xlane.xlu0 %1158
    %1160 = vadd.xlane.f32.xlu0 %v1049
    %v1161 = vpop.xlane.xlu0 %1160
    %1162 = vadd.xlane.f32.xlu0 %v1050
    %v1163 = vpop.xlane.xlu0 %1162
    %1164 = vadd.xlane.f32.xlu0 %v1051
    %v1165 = vpop.xlane.xlu0 %1164
    %1166 = vadd.xlane.f32.xlu0 %v1052
    %v1167 = vpop.xlane.xlu0 %1166
    %1168 = vadd.xlane.f32.xlu0 %v1053
    %v1169 = vpop.xlane.xlu0 %1168
    %1170 = vadd.xlane.f32.xlu0 %v1054
    %v1171 = vpop.xlane.xlu0 %1170
    %1172 = vadd.xlane.f32.xlu0 %v1055
    %v1173 = vpop.xlane.xlu0 %1172
    %1174 = vadd.xlane.f32.xlu0 %v1056
    %v1175 = vpop.xlane.xlu0 %1174
    %1176 = vadd.xlane.f32.xlu0 %v1057
    %v1177 = vpop.xlane.xlu0 %1176
    %1178 = vadd.xlane.f32.xlu0 %v1058
    %v1179 = vpop.xlane.xlu0 %1178
    %1180 = vadd.xlane.f32.xlu0 %v1059
    %v1181 = vpop.xlane.xlu0 %1180
    %1182 = vadd.xlane.f32.xlu0 %v1060
    %v1183 = vpop.xlane.xlu0 %1182
    %1184 = vadd.xlane.f32.xlu0 %v1061
    %v1185 = vpop.xlane.xlu0 %1184
    %1186 = vadd.xlane.f32.xlu0 %v1062
    %v1187 = vpop.xlane.xlu0 %1186
    %1188 = vadd.xlane.f32.xlu0 %v1063
    %v1189 = vpop.xlane.xlu0 %1188
    %1190 = vadd.xlane.f32.xlu0 %v1064
    %v1191 = vpop.xlane.xlu0 %1190
    %1192 = vadd.xlane.f32.xlu0 %v1065
    %v1193 = vpop.xlane.xlu0 %1192
    %v1194 = vadd.f32 %v169, %v617
    %v1195 = vadd.f32 %v171, %v619
    %v1196 = vadd.f32 %v173, %v621
    %v1197 = vadd.f32 %v175, %v623
    %v1198 = vadd.f32 %v177, %v625
    %v1199 = vadd.f32 %v179, %v627
    %v1200 = vadd.f32 %v181, %v629
    %v1201 = vadd.f32 %v183, %v631
    %v1202 = vadd.f32 %v185, %v633
    %v1203 = vadd.f32 %v187, %v635
    %v1204 = vadd.f32 %v189, %v637
    %v1205 = vadd.f32 %v191, %v639
    %v1206 = vadd.f32 %v193, %v641
    %v1207 = vadd.f32 %v195, %v643
    %v1208 = vadd.f32 %v197, %v645
    %v1209 = vadd.f32 %v199, %v647
    %v1210 = vadd.f32 %v201, %v649
    %v1211 = vadd.f32 %v203, %v651
    %v1212 = vadd.f32 %v205, %v653
    %v1213 = vadd.f32 %v207, %v655
    %v1214 = vadd.f32 %v209, %v657
    %v1215 = vadd.f32 %v211, %v659
    %v1216 = vadd.f32 %v213, %v661
    %v1217 = vadd.f32 %v215, %v663
    %v1218 = vadd.f32 %v217, %v665
    %v1219 = vadd.f32 %v219, %v667
    %v1220 = vadd.f32 %v221, %v669
    %v1221 = vadd.f32 %v223, %v671
    %v1222 = vadd.f32 %v225, %v673
    %v1223 = vadd.f32 %v227, %v675
    %v1224 = vadd.f32 %v229, %v677
    %v1225 = vadd.f32 %v231, %v679
    %v1226 = vadd.f32 %v233, %v681
    %v1227 = vadd.f32 %v235, %v683
    %v1228 = vadd.f32 %v237, %v685
    %v1229 = vadd.f32 %v239, %v687
    %v1230 = vadd.f32 %v241, %v689
    %v1231 = vadd.f32 %v243, %v691
    %v1232 = vadd.f32 %v245, %v693
    %v1233 = vadd.f32 %v247, %v695
    %v1234 = vadd.f32 %v249, %v697
    %v1235 = vadd.f32 %v251, %v699
    %v1236 = vadd.f32 %v253, %v701
    %v1237 = vadd.f32 %v255, %v703
    %v1238 = vadd.f32 %v257, %v705
    %v1239 = vadd.f32 %v259, %v707
    %v1240 = vadd.f32 %v261, %v709
    %v1241 = vadd.f32 %v263, %v711
    %v1242 = vadd.f32 %v265, %v713
    %v1243 = vadd.f32 %v267, %v715
    %v1244 = vadd.f32 %v269, %v717
    %v1245 = vadd.f32 %v271, %v719
    %v1246 = vadd.f32 %v273, %v721
    %v1247 = vadd.f32 %v275, %v723
    %v1248 = vadd.f32 %v277, %v725
    %v1249 = vadd.f32 %v279, %v727
    %v1250 = vadd.f32 %v281, %v729
    %v1251 = vadd.f32 %v283, %v731
    %v1252 = vadd.f32 %v285, %v733
    %v1253 = vadd.f32 %v287, %v735
    %v1254 = vadd.f32 %v289, %v737
    %v1255 = vadd.f32 %v291, %v739
    %v1256 = vadd.f32 %v293, %v741
    %v1257 = vadd.f32 %v295, %v743
    %v1258 = vsub.f32 %v1194, %v1067
    %v1259 = vsub.f32 %v1195, %v1069
    %v1260 = vsub.f32 %v1196, %v1071
    %v1261 = vsub.f32 %v1197, %v1073
    %v1262 = vsub.f32 %v1198, %v1075
    %v1263 = vsub.f32 %v1199, %v1077
    %v1264 = vsub.f32 %v1200, %v1079
    %v1265 = vsub.f32 %v1201, %v1081
    %v1266 = vsub.f32 %v1202, %v1083
    %v1267 = vsub.f32 %v1203, %v1085
    %v1268 = vsub.f32 %v1204, %v1087
    %v1269 = vsub.f32 %v1205, %v1089
    %v1270 = vsub.f32 %v1206, %v1091
    %v1271 = vsub.f32 %v1207, %v1093
    %v1272 = vsub.f32 %v1208, %v1095
    %v1273 = vsub.f32 %v1209, %v1097
    %v1274 = vsub.f32 %v1210, %v1099
    %v1275 = vsub.f32 %v1211, %v1101
    %v1276 = vsub.f32 %v1212, %v1103
    %v1277 = vsub.f32 %v1213, %v1105
    %v1278 = vsub.f32 %v1214, %v1107
    %v1279 = vsub.f32 %v1215, %v1109
    %v1280 = vsub.f32 %v1216, %v1111
    %v1281 = vsub.f32 %v1217, %v1113
    %v1282 = vsub.f32 %v1218, %v1115
    %v1283 = vsub.f32 %v1219, %v1117
    %v1284 = vsub.f32 %v1220, %v1119
    %v1285 = vsub.f32 %v1221, %v1121
    %v1286 = vsub.f32 %v1222, %v1123
    %v1287 = vsub.f32 %v1223, %v1125
    %v1288 = vsub.f32 %v1224, %v1127
    %v1289 = vsub.f32 %v1225, %v1129
    %v1290 = vsub.f32 %v1226, %v1131
    %v1291 = vsub.f32 %v1227, %v1133
    %v1292 = vsub.f32 %v1228, %v1135
    %v1293 = vsub.f32 %v1229, %v1137
    %v1294 = vsub.f32 %v1230, %v1139
    %v1295 = vsub.f32 %v1231, %v1141
    %v1296 = vsub.f32 %v1232, %v1143
    %v1297 = vsub.f32 %v1233, %v1145
    %v1298 = vsub.f32 %v1234, %v1147
    %v1299 = vsub.f32 %v1235, %v1149
    %v1300 = vsub.f32 %v1236, %v1151
    %v1301 = vsub.f32 %v1237, %v1153
    %v1302 = vsub.f32 %v1238, %v1155
    %v1303 = vsub.f32 %v1239, %v1157
    %v1304 = vsub.f32 %v1240, %v1159
    %v1305 = vsub.f32 %v1241, %v1161
    %v1306 = vsub.f32 %v1242, %v1163
    %v1307 = vsub.f32 %v1243, %v1165
    %v1308 = vsub.f32 %v1244, %v1167
    %v1309 = vsub.f32 %v1245, %v1169
    %v1310 = vsub.f32 %v1246, %v1171
    %v1311 = vsub.f32 %v1247, %v1173
    %v1312 = vsub.f32 %v1248, %v1175
    %v1313 = vsub.f32 %v1249, %v1177
    %v1314 = vsub.f32 %v1250, %v1179
    %v1315 = vsub.f32 %v1251, %v1181
    %v1316 = vsub.f32 %v1252, %v1183
    %v1317 = vsub.f32 %v1253, %v1185
    %v1318 = vsub.f32 %v1254, %v1187
    %v1319 = vsub.f32 %v1255, %v1189
    %v1320 = vsub.f32 %v1256, %v1191
    %v1321 = vsub.f32 %v1257, %v1193
    %vm1322 = vcmp.ne.s32.totalorder %v104, 4294967295
    %vm1323 = vcmp.ne.s32.totalorder %v105, 4294967295
    %vm1324 = vcmp.ne.s32.totalorder %v106, 4294967295
    %vm1325 = vcmp.ne.s32.totalorder %v107, 4294967295
    %vm1326 = vcmp.ne.s32.totalorder %v108, 4294967295
    %vm1327 = vcmp.ne.s32.totalorder %v109, 4294967295
    %vm1328 = vcmp.ne.s32.totalorder %v110, 4294967295
    %vm1329 = vcmp.ne.s32.totalorder %v111, 4294967295
    %vm1330 = vcmp.ne.s32.totalorder %v112, 4294967295
    %vm1331 = vcmp.ne.s32.totalorder %v113, 4294967295
    %vm1332 = vcmp.ne.s32.totalorder %v114, 4294967295
    %vm1333 = vcmp.ne.s32.totalorder %v115, 4294967295
    %vm1334 = vcmp.ne.s32.totalorder %v116, 4294967295
    %vm1335 = vcmp.ne.s32.totalorder %v117, 4294967295
    %vm1336 = vcmp.ne.s32.totalorder %v118, 4294967295
    %vm1337 = vcmp.ne.s32.totalorder %v119, 4294967295
    %vm1338 = vcmp.ne.s32.totalorder %v120, 4294967295
    %vm1339 = vcmp.ne.s32.totalorder %v121, 4294967295
    %vm1340 = vcmp.ne.s32.totalorder %v122, 4294967295
    %vm1341 = vcmp.ne.s32.totalorder %v123, 4294967295
    %vm1342 = vcmp.ne.s32.totalorder %v124, 4294967295
    %vm1343 = vcmp.ne.s32.totalorder %v125, 4294967295
    %vm1344 = vcmp.ne.s32.totalorder %v126, 4294967295
    %vm1345 = vcmp.ne.s32.totalorder %v127, 4294967295
    %vm1346 = vcmp.ne.s32.totalorder %v128, 4294967295
    %vm1347 = vcmp.ne.s32.totalorder %v129, 4294967295
    %vm1348 = vcmp.ne.s32.totalorder %v130, 4294967295
    %vm1349 = vcmp.ne.s32.totalorder %v131, 4294967295
    %vm1350 = vcmp.ne.s32.totalorder %v132, 4294967295
    %vm1351 = vcmp.ne.s32.totalorder %v133, 4294967295
    %vm1352 = vcmp.ne.s32.totalorder %v134, 4294967295
    %vm1353 = vcmp.ne.s32.totalorder %v135, 4294967295
    %vm1354 = vcmp.ne.s32.totalorder %v136, 4294967295
    %vm1355 = vcmp.ne.s32.totalorder %v137, 4294967295
    %vm1356 = vcmp.ne.s32.totalorder %v138, 4294967295
    %vm1357 = vcmp.ne.s32.totalorder %v139, 4294967295
    %vm1358 = vcmp.ne.s32.totalorder %v140, 4294967295
    %vm1359 = vcmp.ne.s32.totalorder %v141, 4294967295
    %vm1360 = vcmp.ne.s32.totalorder %v142, 4294967295
    %vm1361 = vcmp.ne.s32.totalorder %v143, 4294967295
    %vm1362 = vcmp.ne.s32.totalorder %v144, 4294967295
    %vm1363 = vcmp.ne.s32.totalorder %v145, 4294967295
    %vm1364 = vcmp.ne.s32.totalorder %v146, 4294967295
    %vm1365 = vcmp.ne.s32.totalorder %v147, 4294967295
    %vm1366 = vcmp.ne.s32.totalorder %v148, 4294967295
    %vm1367 = vcmp.ne.s32.totalorder %v149, 4294967295
    %vm1368 = vcmp.ne.s32.totalorder %v150, 4294967295
    %vm1369 = vcmp.ne.s32.totalorder %v151, 4294967295
    %vm1370 = vcmp.ne.s32.totalorder %v152, 4294967295
    %vm1371 = vcmp.ne.s32.totalorder %v153, 4294967295
    %vm1372 = vcmp.ne.s32.totalorder %v154, 4294967295
    %vm1373 = vcmp.ne.s32.totalorder %v155, 4294967295
    %vm1374 = vcmp.ne.s32.totalorder %v156, 4294967295
    %vm1375 = vcmp.ne.s32.totalorder %v157, 4294967295
    %vm1376 = vcmp.ne.s32.totalorder %v158, 4294967295
    %vm1377 = vcmp.ne.s32.totalorder %v159, 4294967295
    %vm1378 = vcmp.ne.s32.totalorder %v160, 4294967295
    %vm1379 = vcmp.ne.s32.totalorder %v161, 4294967295
    %vm1380 = vcmp.ne.s32.totalorder %v162, 4294967295
    %vm1381 = vcmp.ne.s32.totalorder %v163, 4294967295
    %vm1382 = vcmp.ne.s32.totalorder %v164, 4294967295
    %vm1383 = vcmp.ne.s32.totalorder %v165, 4294967295
    %vm1384 = vcmp.ne.s32.totalorder %v166, 4294967295
    %vm1385 = vcmp.ne.s32.totalorder %v167, 4294967295
    %v1386 = vsel %vm1322, %v1258, 0.0
    %v1387 = vsel %vm1323, %v1259, 0.0
    %v1388 = vsel %vm1324, %v1260, 0.0
    %v1389 = vsel %vm1325, %v1261, 0.0
    %v1390 = vsel %vm1326, %v1262, 0.0
    %v1391 = vsel %vm1327, %v1263, 0.0
    %v1392 = vsel %vm1328, %v1264, 0.0
    %v1393 = vsel %vm1329, %v1265, 0.0
    %v1394 = vsel %vm1330, %v1266, 0.0
    %v1395 = vsel %vm1331, %v1267, 0.0
    %v1396 = vsel %vm1332, %v1268, 0.0
    %v1397 = vsel %vm1333, %v1269, 0.0
    %v1398 = vsel %vm1334, %v1270, 0.0
    %v1399 = vsel %vm1335, %v1271, 0.0
    %v1400 = vsel %vm1336, %v1272, 0.0
    %v1401 = vsel %vm1337, %v1273, 0.0
    %v1402 = vsel %vm1338, %v1274, 0.0
    %v1403 = vsel %vm1339, %v1275, 0.0
    %v1404 = vsel %vm1340, %v1276, 0.0
    %v1405 = vsel %vm1341, %v1277, 0.0
    %v1406 = vsel %vm1342, %v1278, 0.0
    %v1407 = vsel %vm1343, %v1279, 0.0
    %v1408 = vsel %vm1344, %v1280, 0.0
    %v1409 = vsel %vm1345, %v1281, 0.0
    %v1410 = vsel %vm1346, %v1282, 0.0
    %v1411 = vsel %vm1347, %v1283, 0.0
    %v1412 = vsel %vm1348, %v1284, 0.0
    %v1413 = vsel %vm1349, %v1285, 0.0
    %v1414 = vsel %vm1350, %v1286, 0.0
    %v1415 = vsel %vm1351, %v1287, 0.0
    %v1416 = vsel %vm1352, %v1288, 0.0
    %v1417 = vsel %vm1353, %v1289, 0.0
    %v1418 = vsel %vm1354, %v1290, 0.0
    %v1419 = vsel %vm1355, %v1291, 0.0
    %v1420 = vsel %vm1356, %v1292, 0.0
    %v1421 = vsel %vm1357, %v1293, 0.0
    %v1422 = vsel %vm1358, %v1294, 0.0
    %v1423 = vsel %vm1359, %v1295, 0.0
    %v1424 = vsel %vm1360, %v1296, 0.0
    %v1425 = vsel %vm1361, %v1297, 0.0
    %v1426 = vsel %vm1362, %v1298, 0.0
    %v1427 = vsel %vm1363, %v1299, 0.0
    %v1428 = vsel %vm1364, %v1300, 0.0
    %v1429 = vsel %vm1365, %v1301, 0.0
    %v1430 = vsel %vm1366, %v1302, 0.0
    %v1431 = vsel %vm1367, %v1303, 0.0
    %v1432 = vsel %vm1368, %v1304, 0.0
    %v1433 = vsel %vm1369, %v1305, 0.0
    %v1434 = vsel %vm1370, %v1306, 0.0
    %v1435 = vsel %vm1371, %v1307, 0.0
    %v1436 = vsel %vm1372, %v1308, 0.0
    %v1437 = vsel %vm1373, %v1309, 0.0
    %v1438 = vsel %vm1374, %v1310, 0.0
    %v1439 = vsel %vm1375, %v1311, 0.0
    %v1440 = vsel %vm1376, %v1312, 0.0
    %v1441 = vsel %vm1377, %v1313, 0.0
    %v1442 = vsel %vm1378, %v1314, 0.0
    %v1443 = vsel %vm1379, %v1315, 0.0
    %v1444 = vsel %vm1380, %v1316, 0.0
    %v1445 = vsel %vm1381, %v1317, 0.0
    %v1446 = vsel %vm1382, %v1318, 0.0
    %v1447 = vsel %vm1383, %v1319, 0.0
    %v1448 = vsel %vm1384, %v1320, 0.0
    %v1449 = vsel %vm1385, %v1321, 0.0
    %vm1450 = vcmask 7168
    %1451 = vst.msk [vmem:[#allocation7] sm:$0xff] %vm1450, %v1386
    %1452 = vst.msk [vmem:[#allocation7 + $0x8] sm:$0xff] %vm1450, %v1387
    %1453 = vst.msk [vmem:[#allocation7 + $0x10] sm:$0xff] %vm1450, %v1388
    %1454 = vst.msk [vmem:[#allocation7 + $0x18] sm:$0xff] %vm1450, %v1389
    %1455 = vst.msk [vmem:[#allocation7 + $0x20] sm:$0xff] %vm1450, %v1390
    %1456 = vst.msk [vmem:[#allocation7 + $0x28] sm:$0xff] %vm1450, %v1391
    %1457 = vst.msk [vmem:[#allocation7 + $0x30] sm:$0xff] %vm1450, %v1392
    %1458 = vst.msk [vmem:[#allocation7 + $0x38] sm:$0xff] %vm1450, %v1393
    %1459 = vst.msk [vmem:[#allocation7 + $0x40] sm:$0xff] %vm1450, %v1394
    %1460 = vst.msk [vmem:[#allocation7 + $0x48] sm:$0xff] %vm1450, %v1395
    %1461 = vst.msk [vmem:[#allocation7 + $0x50] sm:$0xff] %vm1450, %v1396
    %1462 = vst.msk [vmem:[#allocation7 + $0x58] sm:$0xff] %vm1450, %v1397
    %1463 = vst.msk [vmem:[#allocation7 + $0x60] sm:$0xff] %vm1450, %v1398
    %1464 = vst.msk [vmem:[#allocation7 + $0x68] sm:$0xff] %vm1450, %v1399
    %1465 = vst.msk [vmem:[#allocation7 + $0x70] sm:$0xff] %vm1450, %v1400
    %1466 = vst.msk [vmem:[#allocation7 + $0x78] sm:$0xff] %vm1450, %v1401
    %1467 = vst.msk [vmem:[#allocation7 + $0x80] sm:$0xff] %vm1450, %v1402
    %1468 = vst.msk [vmem:[#allocation7 + $0x88] sm:$0xff] %vm1450, %v1403
    %1469 = vst.msk [vmem:[#allocation7 + $0x90] sm:$0xff] %vm1450, %v1404
    %1470 = vst.msk [vmem:[#allocation7 + $0x98] sm:$0xff] %vm1450, %v1405
    %1471 = vst.msk [vmem:[#allocation7 + $0xa0] sm:$0xff] %vm1450, %v1406
    %1472 = vst.msk [vmem:[#allocation7 + $0xa8] sm:$0xff] %vm1450, %v1407
    %1473 = vst.msk [vmem:[#allocation7 + $0xb0] sm:$0xff] %vm1450, %v1408
    %1474 = vst.msk [vmem:[#allocation7 + $0xb8] sm:$0xff] %vm1450, %v1409
    %1475 = vst.msk [vmem:[#allocation7 + $0xc0] sm:$0xff] %vm1450, %v1410
    %1476 = vst.msk [vmem:[#allocation7 + $0xc8] sm:$0xff] %vm1450, %v1411
    %1477 = vst.msk [vmem:[#allocation7 + $0xd0] sm:$0xff] %vm1450, %v1412
    %1478 = vst.msk [vmem:[#allocation7 + $0xd8] sm:$0xff] %vm1450, %v1413
    %1479 = vst.msk [vmem:[#allocation7 + $0xe0] sm:$0xff] %vm1450, %v1414
    %1480 = vst.msk [vmem:[#allocation7 + $0xe8] sm:$0xff] %vm1450, %v1415
    %1481 = vst.msk [vmem:[#allocation7 + $0xf0] sm:$0xff] %vm1450, %v1416
    %1482 = vst.msk [vmem:[#allocation7 + $0xf8] sm:$0xff] %vm1450, %v1417
    %1483 = vst.msk [vmem:[#allocation7 + $0x100] sm:$0xff] %vm1450, %v1418
    %1484 = vst.msk [vmem:[#allocation7 + $0x108] sm:$0xff] %vm1450, %v1419
    %1485 = vst.msk [vmem:[#allocation7 + $0x110] sm:$0xff] %vm1450, %v1420
    %1486 = vst.msk [vmem:[#allocation7 + $0x118] sm:$0xff] %vm1450, %v1421
    %1487 = vst.msk [vmem:[#allocation7 + $0x120] sm:$0xff] %vm1450, %v1422
    %1488 = vst.msk [vmem:[#allocation7 + $0x128] sm:$0xff] %vm1450, %v1423
    %1489 = vst.msk [vmem:[#allocation7 + $0x130] sm:$0xff] %vm1450, %v1424
    %1490 = vst.msk [vmem:[#allocation7 + $0x138] sm:$0xff] %vm1450, %v1425
    %1491 = vst.msk [vmem:[#allocation7 + $0x140] sm:$0xff] %vm1450, %v1426
    %1492 = vst.msk [vmem:[#allocation7 + $0x148] sm:$0xff] %vm1450, %v1427
    %1493 = vst.msk [vmem:[#allocation7 + $0x150] sm:$0xff] %vm1450, %v1428
    %1494 = vst.msk [vmem:[#allocation7 + $0x158] sm:$0xff] %vm1450, %v1429
    %1495 = vst.msk [vmem:[#allocation7 + $0x160] sm:$0xff] %vm1450, %v1430
    %1496 = vst.msk [vmem:[#allocation7 + $0x168] sm:$0xff] %vm1450, %v1431
    %1497 = vst.msk [vmem:[#allocation7 + $0x170] sm:$0xff] %vm1450, %v1432
    %1498 = vst.msk [vmem:[#allocation7 + $0x178] sm:$0xff] %vm1450, %v1433
    %1499 = vst.msk [vmem:[#allocation7 + $0x180] sm:$0xff] %vm1450, %v1434
    %1500 = vst.msk [vmem:[#allocation7 + $0x188] sm:$0xff] %vm1450, %v1435
    %1501 = vst.msk [vmem:[#allocation7 + $0x190] sm:$0xff] %vm1450, %v1436
    %1502 = vst.msk [vmem:[#allocation7 + $0x198] sm:$0xff] %vm1450, %v1437
    %1503 = vst.msk [vmem:[#allocation7 + $0x1a0] sm:$0xff] %vm1450, %v1438
    %1504 = vst.msk [vmem:[#allocation7 + $0x1a8] sm:$0xff] %vm1450, %v1439
    %1505 = vst.msk [vmem:[#allocation7 + $0x1b0] sm:$0xff] %vm1450, %v1440
    %1506 = vst.msk [vmem:[#allocation7 + $0x1b8] sm:$0xff] %vm1450, %v1441
    %1507 = vst.msk [vmem:[#allocation7 + $0x1c0] sm:$0xff] %vm1450, %v1442
    %1508 = vst.msk [vmem:[#allocation7 + $0x1c8] sm:$0xff] %vm1450, %v1443
    %1509 = vst.msk [vmem:[#allocation7 + $0x1d0] sm:$0xff] %vm1450, %v1444
    %1510 = vst.msk [vmem:[#allocation7 + $0x1d8] sm:$0xff] %vm1450, %v1445
    %1511 = vst.msk [vmem:[#allocation7 + $0x1e0] sm:$0xff] %vm1450, %v1446
    %1512 = vst.msk [vmem:[#allocation7 + $0x1e8] sm:$0xff] %vm1450, %v1447
    %1513 = vst.msk [vmem:[#allocation7 + $0x1f0] sm:$0xff] %vm1450, %v1448
    %1514 = vst.msk [vmem:[#allocation7 + $0x1f8] sm:$0xff] %vm1450, %v1449
    // Predicated region
    $region18: #{tpu_custom_call.1} parent=1 // pred_check
      _
    $region19: #{tpu_custom_call.1} parent=1 // pred_check_branch
      %1516 = sbr.rel (0) target = $region21
    $region20: #{tpu_custom_call.1} parent=1 // pred_region
      %s1518 = ssub.s32 8192, 8192
      %1519 = vsyncadd [#allocation4], %s1518
      %s1520 = sshll.u32 [#allocation7], 4
      %s1521 = int_to_ptr.vmem [resolvable:$true] %s1520
      %1526 = dma.vmem_to_hbm [thread:$0]  %s1521, 8192, %s2, [#allocation4], 128, 128, 8
    $region21: #{tpu_custom_call.1} parent=1 // pred_fallthru
      _
    // Predicated region
    $region22: #{tpu_custom_call.1} parent=1 // pred_check
      _
    $region23: #{tpu_custom_call.1} parent=1 // pred_check_branch
      %1528 = sbr.rel (0) target = $region25
    $region24: #{tpu_custom_call.1} parent=1 // pred_region
      %1529 = dma.done [#allocation4], 8192
    $region25: #{tpu_custom_call.1} parent=1 // pred_fallthru
      _
    %1530 = vsyncpa [#allocation3], 1
    %1531 = vsyncpa [#allocation6], 1
    %1532 = vsyncpa [#allocation4], 1

</llo_original>
